<compile_context>
chip_gen: v7x
topology: tpu7x:2x2x1
jax: 0.10.0
libtpu: 0.0.40
codegen_flags: <defaults>
</compile_context>

<pallas_src>
import jax
import jax.numpy as jnp
from jax import lax
from jax.experimental import pallas as pl
from jax.experimental.pallas import tpu as pltpu

HIDDEN = 20
NUM_FEATURES = 37
NUM_CLASSES = 2
NUM_LAYERS = 3
BN_EPS = 1e-5
NEG_SLOPE = 0.2        # GATConv default LeakyReLU slope
H_PAD = 128            # lane-dense padded feature/hidden width


def fused_gat_kernel(x_ref, adj_ref, w_ref, vec_ref, pool_ref,
                     out_ref, node_ref, gemb_ref):
    """Entire GAT_NCI1 forward, VMEM-resident.

    x_ref   : (N, 128)           node features, zero-padded past F=37
    adj_ref : (N, N)             adj[i, j] = 1.0 iff edge j -> i (no self loops)
    w_ref   : (L+1, 128, 128)    per-layer weights; slot L holds the FC weight
    vec_ref : (L+1, 5, 128)      rows = [att_src, att_dst, bias, gamma, beta];
                                 slot L row 2 holds the FC bias
    pool_ref: (G, N)             one-hot graph assignment (global_add_pool)
    outputs : (G,128) logits-pad, (N,128) node-emb-pad, (G,128) graph-emb-pad
    """
    act = x_ref[...]                                   # (N, 128)
    adj = adj_ref[...]                                 # (N, N)

    for l in range(NUM_LAYERS):                        # static unroll (3 layers)
        w = w_ref[l]                                   # (128, 128)
        vec = vec_ref[l]                               # (5, 128)
        att_src = vec[0:1, :]
        att_dst = vec[1:2, :]
        bias = vec[2:3, :]
        gamma = vec[3:4, :]
        beta = vec[4:5, :]

        # Linear transform on the MXU: h = act @ W     (N, 128)
        h = jnp.dot(act, w, preferred_element_type=jnp.float32)

        # Attention logits on the MXU (no XLU reductions / transposes):
        #   a_src : (1, N) row,  a_dst : (N, 1) column
        a_src = lax.dot_general(att_src, h, (((1,), (1,)), ((), ())),
                                preferred_element_type=jnp.float32)
        a_dst = lax.dot_general(h, att_dst, (((1,), (1,)), ((), ())),
                                preferred_element_type=jnp.float32)

        # e[i, j] = leaky_relu(a_dst[i] + a_src[j])  == score of edge j -> i
        e = a_dst + a_src                              # (N, N) broadcast
        e = jnp.where(e > 0, e, NEG_SLOPE * e)

        # Masked softmax over incoming edges (axis=1); single mask multiply.
        e = jnp.where(adj > 0, e, jnp.float32(-1e30))
        m = jnp.max(e, axis=1, keepdims=True)
        p = jnp.exp(e - m) * adj                       # adj is 0/1 -> zeroes masked
        denom = jnp.sum(p, axis=1, keepdims=True)
        safe = jnp.where(denom > 0, denom, 1.0)        # rows w/o in-edges -> all-zero
        attn = p * pl.reciprocal(safe, approx=True)    # EUP, not VALU

        # Aggregate messages on the MXU, add GATConv bias.
        y = jnp.dot(attn, h, preferred_element_type=jnp.float32) + bias

        # BatchNorm1d (training-mode biased batch stats) folded to scale/shift,
        # then ReLU.  Dropout has p=0 -> no-op.
        mean = jnp.mean(y, axis=0, keepdims=True)
        var = jnp.mean((y - mean) ** 2, axis=0, keepdims=True)
        scale = gamma * lax.rsqrt(var + BN_EPS)
        shift = beta - mean * scale
        act = jnp.maximum(y * scale + shift, 0.0)

    # Node embeddings (lane-dense padded store).
    node_ref[...] = act

    # global_add_pool as a matmul: (G, N) @ (N, 128) -> (G, 128)
    gemb = jnp.dot(pool_ref[...], act, preferred_element_type=jnp.float32)
    gemb_ref[...] = gemb

    # Final Linear, using the stacked slot L (zero-padded past (20, 2)).
    wfc = w_ref[NUM_LAYERS]
    vec_fc = vec_ref[NUM_LAYERS]
    bfc = vec_fc[2:3, :]
    out_ref[...] = jnp.dot(gemb, wfc, preferred_element_type=jnp.float32) + bfc


def _vmem_spec():
    return pl.BlockSpec(memory_space=pltpu.MemorySpace.VMEM)


@jax.jit
def gat_nci1_forward(x, adj, pool, w_all, vec_all):
    n, f = x.shape
    g = pool.shape[0]
    x_pad = jnp.pad(x, ((0, 0), (0, H_PAD - f)))       # lane-dense input slab

    out_pad, node_pad, gemb_pad = pl.pallas_call(
        fused_gat_kernel,
        out_shape=(jax.ShapeDtypeStruct((g, H_PAD), jnp.float32),
                   jax.ShapeDtypeStruct((n, H_PAD), jnp.float32),
                   jax.ShapeDtypeStruct((g, H_PAD), jnp.float32)),
        in_specs=[_vmem_spec() for _ in range(5)],
        out_specs=(_vmem_spec(), _vmem_spec(), _vmem_spec()),
    )(x_pad, adj, w_all, vec_all, pool)

    out = out_pad[:, :NUM_CLASSES]
    node_embs = node_pad[:, :HIDDEN]
    graph_emb = gemb_pad[:, :HIDDEN]
    return out, node_embs, graph_emb


def init_params(key):
    """Deterministic synthetic parameters matching GAT_NCI1's shapes."""
    layer_dims = [(NUM_FEATURES, HIDDEN)] + [(HIDDEN, HIDDEN)] * (NUM_LAYERS - 1)
    params = []
    for fin, fout in layer_dims:
        key, k1, k2, k3 = jax.random.split(key, 4)
        lim_w = (6.0 / (fin + fout)) ** 0.5            # glorot, like GATConv
        lim_a = (6.0 / (1 + fout)) ** 0.5
        params.append(dict(
            w=jax.random.uniform(k1, (fin, fout), jnp.float32, -lim_w, lim_w),
            att_src=jax.random.uniform(k2, (1, fout), jnp.float32, -lim_a, lim_a),
            att_dst=jax.random.uniform(k3, (1, fout), jnp.float32, -lim_a, lim_a),
            bias=jnp.zeros((1, fout), jnp.float32),    # GATConv bias init
            gamma=jnp.ones((1, fout), jnp.float32),    # BatchNorm1d weight init
            beta=jnp.zeros((1, fout), jnp.float32),    # BatchNorm1d bias init
        ))
    key, kf1, kf2 = jax.random.split(key, 3)
    lim = 1.0 / HIDDEN ** 0.5
    wfc = jax.random.uniform(kf1, (HIDDEN, NUM_CLASSES), jnp.float32, -lim, lim)
    bfc = jax.random.uniform(kf2, (1, NUM_CLASSES), jnp.float32, -lim, lim)
    return params, wfc, bfc


def pack_params(params, wfc, bfc):
    """Stack all per-layer parameters into two lane-dense, zero-padded arrays."""
    n_stack = NUM_LAYERS + 1                           # +1 slot for the final FC
    w_all = jnp.zeros((n_stack, H_PAD, H_PAD), jnp.float32)
    vec_all = jnp.zeros((n_stack, 5, H_PAD), jnp.float32)
    for l, p in enumerate(params):
        fin, fout = p["w"].shape
        w_all = w_all.at[l, :fin, :fout].set(p["w"])
        vec_all = vec_all.at[l, 0, :fout].set(p["att_src"][0])
        vec_all = vec_all.at[l, 1, :fout].set(p["att_dst"][0])
        vec_all = vec_all.at[l, 2, :fout].set(p["bias"][0])
        vec_all = vec_all.at[l, 3, :fout].set(p["gamma"][0])
        vec_all = vec_all.at[l, 4, :fout].set(p["beta"][0])
    w_all = w_all.at[NUM_LAYERS, :HIDDEN, :NUM_CLASSES].set(wfc)
    vec_all = vec_all.at[NUM_LAYERS, 2, :NUM_CLASSES].set(bfc[0])
    return w_all, vec_all


def gat_nci1_reference(x, adj, pool, params, wfc, bfc):
    """Pure-JAX reference (no Pallas) for a correctness tolerance check."""
    act = x
    for p in params:
        h = act @ p["w"]
        a_src = (h * p["att_src"]).sum(-1)[None, :]    # (1, N)
        a_dst = (h * p["att_dst"]).sum(-1)[:, None]    # (N, 1)
        e = a_dst + a_src
        e = jnp.where(e > 0, e, NEG_SLOPE * e)
        e = jnp.where(adj > 0, e, -jnp.inf)
        m = jnp.max(e, axis=1, keepdims=True)
        m = jnp.where(jnp.isfinite(m), m, 0.0)
        pmat = jnp.exp(e - m) * adj
        denom = pmat.sum(axis=1, keepdims=True)
        attn = pmat / jnp.where(denom > 0, denom, 1.0)
        y = attn @ h + p["bias"]
        mean = y.mean(axis=0, keepdims=True)
        var = ((y - mean) ** 2).mean(axis=0, keepdims=True)
        y = (y - mean) / jnp.sqrt(var + BN_EPS) * p["gamma"] + p["beta"]
        act = jnp.maximum(y, 0.0)
    node_embs = act
    graph_emb = pool @ node_embs
    out = graph_emb @ wfc + bfc
    return out, node_embs, graph_emb


if __name__ == "__main__":
    key = jax.random.PRNGKey(0)

    # Small synthetic batched graph: 2 graphs of 6 nodes each, bidirectional
    # ring edges (every node has >=1 incoming edge; add_self_loops=False).
    N, G = 12, 2
    batch = jnp.array([0] * 6 + [1] * 6, jnp.int32)
    src, dst = [], []
    for start, cnt in [(0, 6), (6, 6)]:
        for k in range(cnt):
            a, b = start + k, start + (k + 1) % cnt
            src += [a, b]
            dst += [b, a]
    edge_index = jnp.array([src, dst], jnp.int32)      # (2, E)

    # Glue: edge list -> dense adjacency mask, batch -> one-hot pooling matrix.
    adj = jnp.zeros((N, N), jnp.float32).at[edge_index[1], edge_index[0]].set(1.0)
    pool = (batch[None, :] == jnp.arange(G)[:, None]).astype(jnp.float32)  # (G, N)

    key, kx, kp = jax.random.split(key, 3)
    x = jax.random.normal(kx, (N, NUM_FEATURES), jnp.float32)
    params, wfc, bfc = init_params(kp)
    w_all, vec_all = pack_params(params, wfc, bfc)

    out, node_embs, graph_emb = gat_nci1_forward(x, adj, pool, w_all, vec_all)
    jax.block_until_ready((out, node_embs, graph_emb))

    assert out.shape == (G, NUM_CLASSES)
    assert node_embs.shape == (N, HIDDEN)
    assert graph_emb.shape == (G, HIDDEN)
    assert bool(jnp.all(jnp.isfinite(out)))
    assert bool(jnp.all(jnp.isfinite(node_embs)))
    assert bool(jnp.all(jnp.isfinite(graph_emb)))

    # Pure-JAX reference check (loose tolerance; kernel uses EUP approx recip).
    out_r, node_r, gemb_r = gat_nci1_reference(x, adj, pool, params, wfc, bfc)
    assert float(jnp.max(jnp.abs(out - out_r))) < 5e-2
    assert float(jnp.max(jnp.abs(node_embs - node_r))) < 5e-2
    assert float(jnp.max(jnp.abs(graph_emb - gemb_r))) < 5e-2

    print("KERNEL_OK")
</pallas_src>

<mosaic_0001>
module attributes {stable_mosaic.version = 11 : i64} {
  func.func @fused_gat_kernel(%arg0: memref<12x128xf32, #tpu.memory_space<vmem>>, %arg1: memref<12x12xf32, #tpu.memory_space<vmem>>, %arg2: memref<4x128x128xf32, #tpu.memory_space<vmem>>, %arg3: memref<4x5x128xf32, #tpu.memory_space<vmem>>, %arg4: memref<2x12xf32, #tpu.memory_space<vmem>>, %arg5: memref<2x128xf32, #tpu.memory_space<vmem>>, %arg6: memref<12x128xf32, #tpu.memory_space<vmem>>, %arg7: memref<2x128xf32, #tpu.memory_space<vmem>>) attributes {dimension_semantics = [], scalar_prefetch = 0 : i64, scratch_operands = 0 : i64, tpu.core_type = #tpu.core_type<tc>} {
    %c0 = arith.constant 0 : index
    %c0_0 = arith.constant 0 : index
    %0 = vector.load %arg0[%c0, %c0_0] : memref<12x128xf32, #tpu.memory_space<vmem>>, vector<12x128xf32>
    %c0_1 = arith.constant 0 : index
    %c0_2 = arith.constant 0 : index
    %1 = vector.load %arg1[%c0_1, %c0_2] : memref<12x12xf32, #tpu.memory_space<vmem>>, vector<12x12xf32>
    %c0_3 = arith.constant 0 : index
    %c0_4 = arith.constant 0 : index
    %c0_5 = arith.constant 0 : index
    %2 = vector.load %arg2[%c0_3, %c0_4, %c0_5] : memref<4x128x128xf32, #tpu.memory_space<vmem>>, vector<1x128x128xf32>
    %3 = vector.shape_cast %2 : vector<1x128x128xf32> to vector<128x128xf32>
    %c0_6 = arith.constant 0 : index
    %c0_7 = arith.constant 0 : index
    %c0_8 = arith.constant 0 : index
    %4 = vector.load %arg3[%c0_6, %c0_7, %c0_8] : memref<4x5x128xf32, #tpu.memory_space<vmem>>, vector<1x5x128xf32>
    %5 = vector.shape_cast %4 : vector<1x5x128xf32> to vector<5x128xf32>
    %6 = vector.extract_strided_slice %5 {offsets = [0, 0], sizes = [1, 128], strides = [1, 1]} : vector<5x128xf32> to vector<1x128xf32>
    %7 = vector.extract_strided_slice %5 {offsets = [1, 0], sizes = [1, 128], strides = [1, 1]} : vector<5x128xf32> to vector<1x128xf32>
    %8 = vector.extract_strided_slice %5 {offsets = [2, 0], sizes = [1, 128], strides = [1, 1]} : vector<5x128xf32> to vector<1x128xf32>
    %9 = vector.extract_strided_slice %5 {offsets = [3, 0], sizes = [1, 128], strides = [1, 1]} : vector<5x128xf32> to vector<1x128xf32>
    %10 = vector.extract_strided_slice %5 {offsets = [4, 0], sizes = [1, 128], strides = [1, 1]} : vector<5x128xf32> to vector<1x128xf32>
    %cst = arith.constant dense<0.000000e+00> : vector<12x128xf32>
    %11 = tpu.matmul %0, %3, %cst {dimension_numbers = #tpu.dot_dimension_numbers<[1], [0], [0], [1], [0, 0, 1, 1], [], []>} : vector<12x128xf32>, vector<128x128xf32>, vector<12x128xf32> -> vector<12x128xf32>
    %cst_9 = arith.constant dense<0.000000e+00> : vector<1x12xf32>
    %12 = tpu.matmul %6, %11, %cst_9 {dimension_numbers = #tpu.dot_dimension_numbers<[1], [1], [0], [0], [0, 0, 1, 0], [], []>} : vector<1x128xf32>, vector<12x128xf32>, vector<1x12xf32> -> vector<1x12xf32>
    %cst_10 = arith.constant dense<0.000000e+00> : vector<12x1xf32>
    %13 = tpu.matmul %11, %7, %cst_10 {dimension_numbers = #tpu.dot_dimension_numbers<[1], [1], [0], [0], [0, 0, 1, 0], [], []>} : vector<12x128xf32>, vector<1x128xf32>, vector<12x1xf32> -> vector<12x1xf32>
    %14 = vector.broadcast %13 : vector<12x1xf32> to vector<12x12xf32>
    %15 = vector.broadcast %12 : vector<1x12xf32> to vector<12x12xf32>
    %16 = arith.addf %14, %15 : vector<12x12xf32>
    %cst_11 = arith.constant 0.000000e+00 : f32
    %17 = vector.broadcast %cst_11 : f32 to vector<12x12xf32>
    %18 = arith.cmpf ogt, %16, %17 : vector<12x12xf32>
    %cst_12 = arith.constant 2.000000e-01 : f32
    %19 = vector.broadcast %cst_12 : f32 to vector<12x12xf32>
    %20 = arith.mulf %19, %16 : vector<12x12xf32>
    %21 = arith.select %18, %16, %20 : vector<12x12xi1>, vector<12x12xf32>
    %cst_13 = arith.constant 0.000000e+00 : f32
    %22 = vector.broadcast %cst_13 : f32 to vector<12x12xf32>
    %23 = arith.cmpf ogt, %1, %22 : vector<12x12xf32>
    %cst_14 = arith.constant -1.000000e+30 : f32
    %24 = vector.broadcast %cst_14 : f32 to vector<12x12xf32>
    %25 = arith.select %23, %21, %24 : vector<12x12xi1>, vector<12x12xf32>
    %cst_15 = arith.constant dense<0xFF800000> : vector<12xf32>
    %26 = vector.multi_reduction <maximumf>, %25, %cst_15 [1] : vector<12x12xf32> to vector<12xf32>
    %27 = vector.shape_cast %26 : vector<12xf32> to vector<12x1xf32>
    %28 = vector.broadcast %27 : vector<12x1xf32> to vector<12x12xf32>
    %29 = arith.subf %25, %28 : vector<12x12xf32>
    %30 = math.exp %29 : vector<12x12xf32>
    %31 = arith.mulf %30, %1 : vector<12x12xf32>
    %cst_16 = arith.constant dense<0.000000e+00> : vector<12xf32>
    %32 = vector.multi_reduction <add>, %31, %cst_16 [1] : vector<12x12xf32> to vector<12xf32>
    %33 = vector.shape_cast %32 : vector<12xf32> to vector<12x1xf32>
    %cst_17 = arith.constant 0.000000e+00 : f32
    %34 = vector.broadcast %cst_17 : f32 to vector<12x1xf32>
    %35 = arith.cmpf ogt, %33, %34 : vector<12x1xf32>
    %cst_18 = arith.constant 1.000000e+00 : f32
    %36 = vector.broadcast %cst_18 : f32 to vector<12x1xf32>
    %37 = arith.select %35, %33, %36 : vector<12x1xi1>, vector<12x1xf32>
    %38 = tpu.reciprocal %37 {approx = true} : vector<12x1xf32> -> vector<12x1xf32>
    %39 = vector.broadcast %38 : vector<12x1xf32> to vector<12x12xf32>
    %40 = arith.mulf %31, %39 : vector<12x12xf32>
    %cst_19 = arith.constant dense<0.000000e+00> : vector<12x128xf32>
    %41 = tpu.matmul %40, %11, %cst_19 {dimension_numbers = #tpu.dot_dimension_numbers<[1], [0], [0], [1], [0, 0, 1, 1], [], []>} : vector<12x12xf32>, vector<12x128xf32>, vector<12x128xf32> -> vector<12x128xf32>
    %42 = vector.broadcast %8 : vector<1x128xf32> to vector<12x128xf32>
    %43 = arith.addf %41, %42 : vector<12x128xf32>
    %cst_20 = arith.constant dense<0.000000e+00> : vector<128xf32>
    %44 = vector.multi_reduction <add>, %43, %cst_20 [0] : vector<12x128xf32> to vector<128xf32>
    %45 = vector.shape_cast %44 : vector<128xf32> to vector<1x128xf32>
    %cst_21 = arith.constant 1.200000e+01 : f32
    %46 = vector.broadcast %cst_21 : f32 to vector<1x128xf32>
    %47 = arith.divf %45, %46 : vector<1x128xf32>
    %48 = vector.broadcast %47 : vector<1x128xf32> to vector<12x128xf32>
    %49 = arith.subf %43, %48 : vector<12x128xf32>
    %50 = arith.mulf %49, %49 : vector<12x128xf32>
    %cst_22 = arith.constant dense<0.000000e+00> : vector<128xf32>
    %51 = vector.multi_reduction <add>, %50, %cst_22 [0] : vector<12x128xf32> to vector<128xf32>
    %52 = vector.shape_cast %51 : vector<128xf32> to vector<1x128xf32>
    %cst_23 = arith.constant 1.200000e+01 : f32
    %53 = vector.broadcast %cst_23 : f32 to vector<1x128xf32>
    %54 = arith.divf %52, %53 : vector<1x128xf32>
    %cst_24 = arith.constant 9.99999974E-6 : f32
    %55 = vector.broadcast %cst_24 : f32 to vector<1x128xf32>
    %56 = arith.addf %54, %55 : vector<1x128xf32>
    %57 = math.rsqrt %56 : vector<1x128xf32>
    %58 = arith.mulf %9, %57 : vector<1x128xf32>
    %59 = arith.mulf %47, %58 : vector<1x128xf32>
    %60 = arith.subf %10, %59 : vector<1x128xf32>
    %61 = vector.broadcast %58 : vector<1x128xf32> to vector<12x128xf32>
    %62 = arith.mulf %43, %61 : vector<12x128xf32>
    %63 = vector.broadcast %60 : vector<1x128xf32> to vector<12x128xf32>
    %64 = arith.addf %62, %63 : vector<12x128xf32>
    %cst_25 = arith.constant 0.000000e+00 : f32
    %65 = vector.broadcast %cst_25 : f32 to vector<12x128xf32>
    %66 = arith.maximumf %64, %65 : vector<12x128xf32>
    %c1 = arith.constant 1 : index
    %c0_26 = arith.constant 0 : index
    %c0_27 = arith.constant 0 : index
    %67 = vector.load %arg2[%c1, %c0_26, %c0_27] : memref<4x128x128xf32, #tpu.memory_space<vmem>>, vector<1x128x128xf32>
    %68 = vector.shape_cast %67 : vector<1x128x128xf32> to vector<128x128xf32>
    %c1_28 = arith.constant 1 : index
    %c0_29 = arith.constant 0 : index
    %c0_30 = arith.constant 0 : index
    %69 = vector.load %arg3[%c1_28, %c0_29, %c0_30] : memref<4x5x128xf32, #tpu.memory_space<vmem>>, vector<1x5x128xf32>
    %70 = vector.shape_cast %69 : vector<1x5x128xf32> to vector<5x128xf32>
    %71 = vector.extract_strided_slice %70 {offsets = [0, 0], sizes = [1, 128], strides = [1, 1]} : vector<5x128xf32> to vector<1x128xf32>
    %72 = vector.extract_strided_slice %70 {offsets = [1, 0], sizes = [1, 128], strides = [1, 1]} : vector<5x128xf32> to vector<1x128xf32>
    %73 = vector.extract_strided_slice %70 {offsets = [2, 0], sizes = [1, 128], strides = [1, 1]} : vector<5x128xf32> to vector<1x128xf32>
    %74 = vector.extract_strided_slice %70 {offsets = [3, 0], sizes = [1, 128], strides = [1, 1]} : vector<5x128xf32> to vector<1x128xf32>
    %75 = vector.extract_strided_slice %70 {offsets = [4, 0], sizes = [1, 128], strides = [1, 1]} : vector<5x128xf32> to vector<1x128xf32>
    %cst_31 = arith.constant dense<0.000000e+00> : vector<12x128xf32>
    %76 = tpu.matmul %66, %68, %cst_31 {dimension_numbers = #tpu.dot_dimension_numbers<[1], [0], [0], [1], [0, 0, 1, 1], [], []>} : vector<12x128xf32>, vector<128x128xf32>, vector<12x128xf32> -> vector<12x128xf32>
    %cst_32 = arith.constant dense<0.000000e+00> : vector<1x12xf32>
    %77 = tpu.matmul %71, %76, %cst_32 {dimension_numbers = #tpu.dot_dimension_numbers<[1], [1], [0], [0], [0, 0, 1, 0], [], []>} : vector<1x128xf32>, vector<12x128xf32>, vector<1x12xf32> -> vector<1x12xf32>
    %cst_33 = arith.constant dense<0.000000e+00> : vector<12x1xf32>
    %78 = tpu.matmul %76, %72, %cst_33 {dimension_numbers = #tpu.dot_dimension_numbers<[1], [1], [0], [0], [0, 0, 1, 0], [], []>} : vector<12x128xf32>, vector<1x128xf32>, vector<12x1xf32> -> vector<12x1xf32>
    %79 = vector.broadcast %78 : vector<12x1xf32> to vector<12x12xf32>
    %80 = vector.broadcast %77 : vector<1x12xf32> to vector<12x12xf32>
    %81 = arith.addf %79, %80 : vector<12x12xf32>
    %cst_34 = arith.constant 0.000000e+00 : f32
    %82 = vector.broadcast %cst_34 : f32 to vector<12x12xf32>
    %83 = arith.cmpf ogt, %81, %82 : vector<12x12xf32>
    %cst_35 = arith.constant 2.000000e-01 : f32
    %84 = vector.broadcast %cst_35 : f32 to vector<12x12xf32>
    %85 = arith.mulf %84, %81 : vector<12x12xf32>
    %86 = arith.select %83, %81, %85 : vector<12x12xi1>, vector<12x12xf32>
    %cst_36 = arith.constant 0.000000e+00 : f32
    %87 = vector.broadcast %cst_36 : f32 to vector<12x12xf32>
    %88 = arith.cmpf ogt, %1, %87 : vector<12x12xf32>
    %cst_37 = arith.constant -1.000000e+30 : f32
    %89 = vector.broadcast %cst_37 : f32 to vector<12x12xf32>
    %90 = arith.select %88, %86, %89 : vector<12x12xi1>, vector<12x12xf32>
    %cst_38 = arith.constant dense<0xFF800000> : vector<12xf32>
    %91 = vector.multi_reduction <maximumf>, %90, %cst_38 [1] : vector<12x12xf32> to vector<12xf32>
    %92 = vector.shape_cast %91 : vector<12xf32> to vector<12x1xf32>
    %93 = vector.broadcast %92 : vector<12x1xf32> to vector<12x12xf32>
    %94 = arith.subf %90, %93 : vector<12x12xf32>
    %95 = math.exp %94 : vector<12x12xf32>
    %96 = arith.mulf %95, %1 : vector<12x12xf32>
    %cst_39 = arith.constant dense<0.000000e+00> : vector<12xf32>
    %97 = vector.multi_reduction <add>, %96, %cst_39 [1] : vector<12x12xf32> to vector<12xf32>
    %98 = vector.shape_cast %97 : vector<12xf32> to vector<12x1xf32>
    %cst_40 = arith.constant 0.000000e+00 : f32
    %99 = vector.broadcast %cst_40 : f32 to vector<12x1xf32>
    %100 = arith.cmpf ogt, %98, %99 : vector<12x1xf32>
    %cst_41 = arith.constant 1.000000e+00 : f32
    %101 = vector.broadcast %cst_41 : f32 to vector<12x1xf32>
    %102 = arith.select %100, %98, %101 : vector<12x1xi1>, vector<12x1xf32>
    %103 = tpu.reciprocal %102 {approx = true} : vector<12x1xf32> -> vector<12x1xf32>
    %104 = vector.broadcast %103 : vector<12x1xf32> to vector<12x12xf32>
    %105 = arith.mulf %96, %104 : vector<12x12xf32>
    %cst_42 = arith.constant dense<0.000000e+00> : vector<12x128xf32>
    %106 = tpu.matmul %105, %76, %cst_42 {dimension_numbers = #tpu.dot_dimension_numbers<[1], [0], [0], [1], [0, 0, 1, 1], [], []>} : vector<12x12xf32>, vector<12x128xf32>, vector<12x128xf32> -> vector<12x128xf32>
    %107 = vector.broadcast %73 : vector<1x128xf32> to vector<12x128xf32>
    %108 = arith.addf %106, %107 : vector<12x128xf32>
    %cst_43 = arith.constant dense<0.000000e+00> : vector<128xf32>
    %109 = vector.multi_reduction <add>, %108, %cst_43 [0] : vector<12x128xf32> to vector<128xf32>
    %110 = vector.shape_cast %109 : vector<128xf32> to vector<1x128xf32>
    %cst_44 = arith.constant 1.200000e+01 : f32
    %111 = vector.broadcast %cst_44 : f32 to vector<1x128xf32>
    %112 = arith.divf %110, %111 : vector<1x128xf32>
    %113 = vector.broadcast %112 : vector<1x128xf32> to vector<12x128xf32>
    %114 = arith.subf %108, %113 : vector<12x128xf32>
    %115 = arith.mulf %114, %114 : vector<12x128xf32>
    %cst_45 = arith.constant dense<0.000000e+00> : vector<128xf32>
    %116 = vector.multi_reduction <add>, %115, %cst_45 [0] : vector<12x128xf32> to vector<128xf32>
    %117 = vector.shape_cast %116 : vector<128xf32> to vector<1x128xf32>
    %cst_46 = arith.constant 1.200000e+01 : f32
    %118 = vector.broadcast %cst_46 : f32 to vector<1x128xf32>
    %119 = arith.divf %117, %118 : vector<1x128xf32>
    %cst_47 = arith.constant 9.99999974E-6 : f32
    %120 = vector.broadcast %cst_47 : f32 to vector<1x128xf32>
    %121 = arith.addf %119, %120 : vector<1x128xf32>
    %122 = math.rsqrt %121 : vector<1x128xf32>
    %123 = arith.mulf %74, %122 : vector<1x128xf32>
    %124 = arith.mulf %112, %123 : vector<1x128xf32>
    %125 = arith.subf %75, %124 : vector<1x128xf32>
    %126 = vector.broadcast %123 : vector<1x128xf32> to vector<12x128xf32>
    %127 = arith.mulf %108, %126 : vector<12x128xf32>
    %128 = vector.broadcast %125 : vector<1x128xf32> to vector<12x128xf32>
    %129 = arith.addf %127, %128 : vector<12x128xf32>
    %cst_48 = arith.constant 0.000000e+00 : f32
    %130 = vector.broadcast %cst_48 : f32 to vector<12x128xf32>
    %131 = arith.maximumf %129, %130 : vector<12x128xf32>
    %c2 = arith.constant 2 : index
    %c0_49 = arith.constant 0 : index
    %c0_50 = arith.constant 0 : index
    %132 = vector.load %arg2[%c2, %c0_49, %c0_50] : memref<4x128x128xf32, #tpu.memory_space<vmem>>, vector<1x128x128xf32>
    %133 = vector.shape_cast %132 : vector<1x128x128xf32> to vector<128x128xf32>
    %c2_51 = arith.constant 2 : index
    %c0_52 = arith.constant 0 : index
    %c0_53 = arith.constant 0 : index
    %134 = vector.load %arg3[%c2_51, %c0_52, %c0_53] : memref<4x5x128xf32, #tpu.memory_space<vmem>>, vector<1x5x128xf32>
    %135 = vector.shape_cast %134 : vector<1x5x128xf32> to vector<5x128xf32>
    %136 = vector.extract_strided_slice %135 {offsets = [0, 0], sizes = [1, 128], strides = [1, 1]} : vector<5x128xf32> to vector<1x128xf32>
    %137 = vector.extract_strided_slice %135 {offsets = [1, 0], sizes = [1, 128], strides = [1, 1]} : vector<5x128xf32> to vector<1x128xf32>
    %138 = vector.extract_strided_slice %135 {offsets = [2, 0], sizes = [1, 128], strides = [1, 1]} : vector<5x128xf32> to vector<1x128xf32>
    %139 = vector.extract_strided_slice %135 {offsets = [3, 0], sizes = [1, 128], strides = [1, 1]} : vector<5x128xf32> to vector<1x128xf32>
    %140 = vector.extract_strided_slice %135 {offsets = [4, 0], sizes = [1, 128], strides = [1, 1]} : vector<5x128xf32> to vector<1x128xf32>
    %cst_54 = arith.constant dense<0.000000e+00> : vector<12x128xf32>
    %141 = tpu.matmul %131, %133, %cst_54 {dimension_numbers = #tpu.dot_dimension_numbers<[1], [0], [0], [1], [0, 0, 1, 1], [], []>} : vector<12x128xf32>, vector<128x128xf32>, vector<12x128xf32> -> vector<12x128xf32>
    %cst_55 = arith.constant dense<0.000000e+00> : vector<1x12xf32>
    %142 = tpu.matmul %136, %141, %cst_55 {dimension_numbers = #tpu.dot_dimension_numbers<[1], [1], [0], [0], [0, 0, 1, 0], [], []>} : vector<1x128xf32>, vector<12x128xf32>, vector<1x12xf32> -> vector<1x12xf32>
    %cst_56 = arith.constant dense<0.000000e+00> : vector<12x1xf32>
    %143 = tpu.matmul %141, %137, %cst_56 {dimension_numbers = #tpu.dot_dimension_numbers<[1], [1], [0], [0], [0, 0, 1, 0], [], []>} : vector<12x128xf32>, vector<1x128xf32>, vector<12x1xf32> -> vector<12x1xf32>
    %144 = vector.broadcast %143 : vector<12x1xf32> to vector<12x12xf32>
    %145 = vector.broadcast %142 : vector<1x12xf32> to vector<12x12xf32>
    %146 = arith.addf %144, %145 : vector<12x12xf32>
    %cst_57 = arith.constant 0.000000e+00 : f32
    %147 = vector.broadcast %cst_57 : f32 to vector<12x12xf32>
    %148 = arith.cmpf ogt, %146, %147 : vector<12x12xf32>
    %cst_58 = arith.constant 2.000000e-01 : f32
    %149 = vector.broadcast %cst_58 : f32 to vector<12x12xf32>
    %150 = arith.mulf %149, %146 : vector<12x12xf32>
    %151 = arith.select %148, %146, %150 : vector<12x12xi1>, vector<12x12xf32>
    %cst_59 = arith.constant 0.000000e+00 : f32
    %152 = vector.broadcast %cst_59 : f32 to vector<12x12xf32>
    %153 = arith.cmpf ogt, %1, %152 : vector<12x12xf32>
    %cst_60 = arith.constant -1.000000e+30 : f32
    %154 = vector.broadcast %cst_60 : f32 to vector<12x12xf32>
    %155 = arith.select %153, %151, %154 : vector<12x12xi1>, vector<12x12xf32>
    %cst_61 = arith.constant dense<0xFF800000> : vector<12xf32>
    %156 = vector.multi_reduction <maximumf>, %155, %cst_61 [1] : vector<12x12xf32> to vector<12xf32>
    %157 = vector.shape_cast %156 : vector<12xf32> to vector<12x1xf32>
    %158 = vector.broadcast %157 : vector<12x1xf32> to vector<12x12xf32>
    %159 = arith.subf %155, %158 : vector<12x12xf32>
    %160 = math.exp %159 : vector<12x12xf32>
    %161 = arith.mulf %160, %1 : vector<12x12xf32>
    %cst_62 = arith.constant dense<0.000000e+00> : vector<12xf32>
    %162 = vector.multi_reduction <add>, %161, %cst_62 [1] : vector<12x12xf32> to vector<12xf32>
    %163 = vector.shape_cast %162 : vector<12xf32> to vector<12x1xf32>
    %cst_63 = arith.constant 0.000000e+00 : f32
    %164 = vector.broadcast %cst_63 : f32 to vector<12x1xf32>
    %165 = arith.cmpf ogt, %163, %164 : vector<12x1xf32>
    %cst_64 = arith.constant 1.000000e+00 : f32
    %166 = vector.broadcast %cst_64 : f32 to vector<12x1xf32>
    %167 = arith.select %165, %163, %166 : vector<12x1xi1>, vector<12x1xf32>
    %168 = tpu.reciprocal %167 {approx = true} : vector<12x1xf32> -> vector<12x1xf32>
    %169 = vector.broadcast %168 : vector<12x1xf32> to vector<12x12xf32>
    %170 = arith.mulf %161, %169 : vector<12x12xf32>
    %cst_65 = arith.constant dense<0.000000e+00> : vector<12x128xf32>
    %171 = tpu.matmul %170, %141, %cst_65 {dimension_numbers = #tpu.dot_dimension_numbers<[1], [0], [0], [1], [0, 0, 1, 1], [], []>} : vector<12x12xf32>, vector<12x128xf32>, vector<12x128xf32> -> vector<12x128xf32>
    %172 = vector.broadcast %138 : vector<1x128xf32> to vector<12x128xf32>
    %173 = arith.addf %171, %172 : vector<12x128xf32>
    %cst_66 = arith.constant dense<0.000000e+00> : vector<128xf32>
    %174 = vector.multi_reduction <add>, %173, %cst_66 [0] : vector<12x128xf32> to vector<128xf32>
    %175 = vector.shape_cast %174 : vector<128xf32> to vector<1x128xf32>
    %cst_67 = arith.constant 1.200000e+01 : f32
    %176 = vector.broadcast %cst_67 : f32 to vector<1x128xf32>
    %177 = arith.divf %175, %176 : vector<1x128xf32>
    %178 = vector.broadcast %177 : vector<1x128xf32> to vector<12x128xf32>
    %179 = arith.subf %173, %178 : vector<12x128xf32>
    %180 = arith.mulf %179, %179 : vector<12x128xf32>
    %cst_68 = arith.constant dense<0.000000e+00> : vector<128xf32>
    %181 = vector.multi_reduction <add>, %180, %cst_68 [0] : vector<12x128xf32> to vector<128xf32>
    %182 = vector.shape_cast %181 : vector<128xf32> to vector<1x128xf32>
    %cst_69 = arith.constant 1.200000e+01 : f32
    %183 = vector.broadcast %cst_69 : f32 to vector<1x128xf32>
    %184 = arith.divf %182, %183 : vector<1x128xf32>
    %cst_70 = arith.constant 9.99999974E-6 : f32
    %185 = vector.broadcast %cst_70 : f32 to vector<1x128xf32>
    %186 = arith.addf %184, %185 : vector<1x128xf32>
    %187 = math.rsqrt %186 : vector<1x128xf32>
    %188 = arith.mulf %139, %187 : vector<1x128xf32>
    %189 = arith.mulf %177, %188 : vector<1x128xf32>
    %190 = arith.subf %140, %189 : vector<1x128xf32>
    %191 = vector.broadcast %188 : vector<1x128xf32> to vector<12x128xf32>
    %192 = arith.mulf %173, %191 : vector<12x128xf32>
    %193 = vector.broadcast %190 : vector<1x128xf32> to vector<12x128xf32>
    %194 = arith.addf %192, %193 : vector<12x128xf32>
    %cst_71 = arith.constant 0.000000e+00 : f32
    %195 = vector.broadcast %cst_71 : f32 to vector<12x128xf32>
    %196 = arith.maximumf %194, %195 : vector<12x128xf32>
    %c0_72 = arith.constant 0 : index
    %c0_73 = arith.constant 0 : index
    %197 = vector.load %arg6[%c0_72, %c0_73] : memref<12x128xf32, #tpu.memory_space<vmem>>, vector<12x128xf32>
    tpu.vector_store %arg6[%c0_72, %c0_73], %196 {strides = array<i32>} : memref<12x128xf32, #tpu.memory_space<vmem>>, vector<12x128xf32>,
    %c0_74 = arith.constant 0 : index
    %c0_75 = arith.constant 0 : index
    %198 = vector.load %arg4[%c0_74, %c0_75] : memref<2x12xf32, #tpu.memory_space<vmem>>, vector<2x12xf32>
    %cst_76 = arith.constant dense<0.000000e+00> : vector<2x128xf32>
    %199 = tpu.matmul %198, %196, %cst_76 {dimension_numbers = #tpu.dot_dimension_numbers<[1], [0], [0], [1], [0, 0, 1, 1], [], []>} : vector<2x12xf32>, vector<12x128xf32>, vector<2x128xf32> -> vector<2x128xf32>
    %c0_77 = arith.constant 0 : index
    %c0_78 = arith.constant 0 : index
    %200 = vector.load %arg7[%c0_77, %c0_78] : memref<2x128xf32, #tpu.memory_space<vmem>>, vector<2x128xf32>
    tpu.vector_store %arg7[%c0_77, %c0_78], %199 {strides = array<i32>} : memref<2x128xf32, #tpu.memory_space<vmem>>, vector<2x128xf32>,
    %c3 = arith.constant 3 : index
    %c0_79 = arith.constant 0 : index
    %c0_80 = arith.constant 0 : index
    %201 = vector.load %arg2[%c3, %c0_79, %c0_80] : memref<4x128x128xf32, #tpu.memory_space<vmem>>, vector<1x128x128xf32>
    %202 = vector.shape_cast %201 : vector<1x128x128xf32> to vector<128x128xf32>
    %c3_81 = arith.constant 3 : index
    %c0_82 = arith.constant 0 : index
    %c0_83 = arith.constant 0 : index
    %203 = vector.load %arg3[%c3_81, %c0_82, %c0_83] : memref<4x5x128xf32, #tpu.memory_space<vmem>>, vector<1x5x128xf32>
    %204 = vector.shape_cast %203 : vector<1x5x128xf32> to vector<5x128xf32>
    %205 = vector.extract_strided_slice %204 {offsets = [2, 0], sizes = [1, 128], strides = [1, 1]} : vector<5x128xf32> to vector<1x128xf32>
    %cst_84 = arith.constant dense<0.000000e+00> : vector<2x128xf32>
    %206 = tpu.matmul %199, %202, %cst_84 {dimension_numbers = #tpu.dot_dimension_numbers<[1], [0], [0], [1], [0, 0, 1, 1], [], []>} : vector<2x128xf32>, vector<128x128xf32>, vector<2x128xf32> -> vector<2x128xf32>
    %207 = vector.broadcast %205 : vector<1x128xf32> to vector<2x128xf32>
    %208 = arith.addf %206, %207 : vector<2x128xf32>
    %c0_85 = arith.constant 0 : index
    %c0_86 = arith.constant 0 : index
    %209 = vector.load %arg5[%c0_85, %c0_86] : memref<2x128xf32, #tpu.memory_space<vmem>>, vector<2x128xf32>
    tpu.vector_store %arg5[%c0_85, %c0_86], %208 {strides = array<i32>} : memref<2x128xf32, #tpu.memory_space<vmem>>, vector<2x128xf32>,
    return
  }
}

</mosaic_0001>

<llo_original>
// kernel: gat_nci1_forward.1
$region0: #{gat_nci1_forward.1}
  #allocation0 [shape = 'u32[]', space=smem, size = 0x4, offset = 0x4, fixed_abs, tag = 'smem constant byte address 0x4 - core index']
  #allocation1 [shape = 'u32[144,128]{1,0:T(1,128)}', space=vmem, size = 0x12000, scoped, tag = 'internal scratch']
  %s0 = inlined_call_operand.vmem [shape: f32[12,128], index: 0, kind: input, shape index: {}]
  %s1 = inlined_call_operand.vmem [shape: f32[12,12], index: 1, kind: input, shape index: {}]
  %s2 = inlined_call_operand.hbm [shape: f32[4,128,128], index: 2, kind: input, shape index: {}]
  %s3 = inlined_call_operand.vmem [shape: f32[4,5,128], index: 3, kind: input, shape index: {}]
  %s4 = inlined_call_operand.vmem [shape: f32[2,12], index: 4, kind: input, shape index: {}]
  %s5 = inlined_call_operand.hbm [shape: f32[2,128], index: 5, kind: output, shape index: {0}]
  %s6 = inlined_call_operand.hbm [shape: f32[12,128], index: 6, kind: output, shape index: {1}]
  %s7 = inlined_call_operand.hbm [shape: f32[2,128], index: 7, kind: output, shape index: {2}]
  %8 = xla_tuple %s5, %s6, %s7
  %s9 = sld [smem:[#allocation0]]
  $region50: #{gat_nci1_forward.1} parent=0
    _
  %s11 = ssub.s32 1, %s9
  %s12 = scalar_select 0, %s11, %s9
  $region1: #{gat_nci1_forward.1} parent=0
    #allocation2 [shape = 'u8[262144]{0}', space=vmem, size = 0x40000, scoped, tag = 'input window, operand 2, single buffered']
    #allocation3 [shape = 's32[1]{0}', space=sflag, size = 0x4, scoped, tag = 'scoped memory for gat_nci1_forward.1']
    #allocation4 [shape = 's32[1]{0}', space=sflag, size = 0x4, scoped, tag = 'scoped memory for gat_nci1_forward.1']
    #allocation5 [shape = 'u8[1024]{0}', space=vmem, size = 0x400, scoped, tag = 'output window, operand 0, single buffered']
    #allocation6 [shape = 'u8[8192]{0}', space=vmem, size = 0x2000, scoped, tag = 'output window, operand 1, single buffered']
    #allocation7 [shape = 's32[1]{0}', space=sflag, size = 0x4, scoped, tag = 'scoped memory for gat_nci1_forward.1']
    #allocation8 [shape = 'u8[1024]{0}', space=vmem, size = 0x400, scoped, tag = 'output window, operand 2, single buffered']
    %13 = vsyncpa [#allocation3], 0
    %14 = vsyncpa [#allocation4], 0
    %15 = vsyncpa [#allocation7], 0
    // Predicated region
    $region2: #{gat_nci1_forward.1} parent=1 // pred_check
      _
    $region3: #{gat_nci1_forward.1} parent=1 // pred_check_branch
      %17 = sbr.rel (0) target = $region5
    $region4: #{gat_nci1_forward.1} parent=1 // pred_region
      _
    $region5: #{gat_nci1_forward.1} parent=1 // pred_fallthru
      _
    // Predicated region
    $region6: #{gat_nci1_forward.1} parent=1 // pred_check
      _
    $region7: #{gat_nci1_forward.1} parent=1 // pred_check_branch
      %19 = sbr.rel (0) target = $region9
    $region8: #{gat_nci1_forward.1} parent=1 // pred_region
      _
    $region9: #{gat_nci1_forward.1} parent=1 // pred_fallthru
      _
    // Predicated region
    $region10: #{gat_nci1_forward.1} parent=1 // pred_check
      _
    $region11: #{gat_nci1_forward.1} parent=1 // pred_check_branch
      %21 = sbr.rel (0) target = $region13
    $region12: #{gat_nci1_forward.1} parent=1 // pred_region
      %s23 = ssub.s32 8192, 8192
      %24 = vsyncadd [#allocation3], %s23
      %s25 = sshll.u32 [#allocation2], 4
      %s26 = int_to_ptr.vmem [resolvable:$true] %s25
      %31 = dma.hbm_to_vmem [thread:$0]  %s2, 8192, %s26, [#allocation3], 128, 128, 8
    $region13: #{gat_nci1_forward.1} parent=1 // pred_fallthru
      _
    // Predicated region
    $region14: #{gat_nci1_forward.1} parent=1 // pred_check
      _
    $region15: #{gat_nci1_forward.1} parent=1 // pred_check_branch
      %33 = sbr.rel (0) target = $region17
    $region16: #{gat_nci1_forward.1} parent=1 // pred_region
      _
    $region17: #{gat_nci1_forward.1} parent=1 // pred_fallthru
      _
    // Predicated region
    $region18: #{gat_nci1_forward.1} parent=1 // pred_check
      _
    $region19: #{gat_nci1_forward.1} parent=1 // pred_check_branch
      %35 = sbr.rel (0) target = $region21
    $region20: #{gat_nci1_forward.1} parent=1 // pred_region
      _
    $region21: #{gat_nci1_forward.1} parent=1 // pred_fallthru
      _
    // Predicated region
    $region22: #{gat_nci1_forward.1} parent=1 // pred_check
      _
    $region23: #{gat_nci1_forward.1} parent=1 // pred_check_branch
      %37 = sbr.rel (0) target = $region25
    $region24: #{gat_nci1_forward.1} parent=1 // pred_region
      %38 = dma.done [#allocation3], 8192
    $region25: #{gat_nci1_forward.1} parent=1 // pred_fallthru
      _
    %v39 = vld [vmem:[%s0] sm:$0xff]
    %v40 = vld [vmem:[%s0 + $0x8] sm:$0xf]
    %v41 = vld [vmem:[%s1] sm:$0xff]
    %v42 = vld [vmem:[%s1 + $0x8] sm:$0xf]
    %v43 = vld [vmem:[#allocation2] sm:$0xff]
    %v44 = vld [vmem:[#allocation2 + $0x8] sm:$0xff]
    %v45 = vld [vmem:[#allocation2 + $0x10] sm:$0xff]
    %v46 = vld [vmem:[#allocation2 + $0x18] sm:$0xff]
    %v47 = vld [vmem:[#allocation2 + $0x20] sm:$0xff]
    %v48 = vld [vmem:[#allocation2 + $0x28] sm:$0xff]
    %v49 = vld [vmem:[#allocation2 + $0x30] sm:$0xff]
    %v50 = vld [vmem:[#allocation2 + $0x38] sm:$0xff]
    %v51 = vld [vmem:[#allocation2 + $0x40] sm:$0xff]
    %v52 = vld [vmem:[#allocation2 + $0x48] sm:$0xff]
    %v53 = vld [vmem:[#allocation2 + $0x50] sm:$0xff]
    %v54 = vld [vmem:[#allocation2 + $0x58] sm:$0xff]
    %v55 = vld [vmem:[#allocation2 + $0x60] sm:$0xff]
    %v56 = vld [vmem:[#allocation2 + $0x68] sm:$0xff]
    %v57 = vld [vmem:[#allocation2 + $0x70] sm:$0xff]
    %v58 = vld [vmem:[#allocation2 + $0x78] sm:$0xff]
    %v59 = vld [vmem:[%s3] sm:$0x1f]
    %60 = vmatprep.subr.mxu0 0.0
    %61 = vmatpush1.msra.mxu0 %v43
    %62 = vmatprep.subr.mxu0 0.0
    %63 = vmatpush1.msra.mxu0 %v44
    %64 = vmatprep.subr.mxu0 0.0
    %65 = vmatpush1.msra.mxu0 %v45
    %66 = vmatprep.subr.mxu0 0.0
    %67 = vmatpush1.msra.mxu0 %v46
    %68 = vmatprep.subr.mxu0 0.0
    %69 = vmatpush1.msra.mxu0 %v47
    %70 = vmatprep.subr.mxu0 0.0
    %71 = vmatpush1.msra.mxu0 %v48
    %72 = vmatprep.subr.mxu0 0.0
    %73 = vmatpush1.msra.mxu0 %v49
    %74 = vmatprep.subr.mxu0 0.0
    %75 = vmatpush1.msra.mxu0 %v50
    %76 = vmatprep.subr.mxu0 0.0
    %77 = vmatpush1.msra.mxu0 %v51
    %78 = vmatprep.subr.mxu0 0.0
    %79 = vmatpush1.msra.mxu0 %v52
    %80 = vmatprep.subr.mxu0 0.0
    %81 = vmatpush1.msra.mxu0 %v53
    %82 = vmatprep.subr.mxu0 0.0
    %83 = vmatpush1.msra.mxu0 %v54
    %84 = vmatprep.subr.mxu0 0.0
    %85 = vmatpush1.msra.mxu0 %v55
    %86 = vmatprep.subr.mxu0 0.0
    %87 = vmatpush1.msra.mxu0 %v56
    %88 = vmatprep.subr.mxu0 0.0
    %89 = vmatpush1.msra.mxu0 %v57
    %90 = vmatprep.subr.mxu0 0.0
    %91 = vmatpush1.msra.mxu0 %v58
    %92 = vmatprep.subr.mxu0 0.0
    %93 = vmatpush1.msra.mxu0 0.0
    %94 = vmatprep.subr.mxu0 0.0
    %95 = vmatpush1.msra.mxu0 0.0
    %96 = vmatprep.subr.mxu0 0.0
    %97 = vmatpush1.msra.mxu0 0.0
    %98 = vmatprep.subr.mxu0 0.0
    %99 = vmatpush1.msra.mxu0 0.0
    %100 = vmatprep.subr.mxu0 0.0
    %101 = vmatpush1.msra.mxu0 0.0
    %102 = vmatprep.subr.mxu0 0.0
    %103 = vmatpush1.msra.mxu0 0.0
    %104 = vmatprep.subr.mxu0 0.0
    %105 = vmatpush1.msra.mxu0 0.0
    %106 = vmatprep.subr.mxu0 0.0
    %107 = vmatpush1.msra.mxu0 0.0
    %108 = vmatprep.subr.mxu0 0.0
    %109 = vmatpush1.msra.mxu0 0.0
    %110 = vmatprep.subr.mxu0 0.0
    %111 = vmatpush1.msra.mxu0 0.0
    %112 = vmatprep.subr.mxu0 0.0
    %113 = vmatpush1.msra.mxu0 0.0
    %114 = vmatprep.subr.mxu0 0.0
    %115 = vmatpush1.msra.mxu0 0.0
    %116 = vmatprep.subr.mxu0 0.0
    %117 = vmatpush1.msra.mxu0 0.0
    %118 = vmatprep.subr.mxu0 0.0
    %119 = vmatpush1.msra.mxu0 0.0
    %120 = vmatprep.subr.mxu0 0.0
    %121 = vmatpush1.msra.mxu0 0.0
    %122 = vmatprep.subr.mxu0 0.0
    %123 = vmatpush1.msra.mxu0 0.0
    %124 = vmatprep.mubr.f32.mxu0 0.0
    %125 = vmatmul.mubr.f32.gmra.mrb[0].mxu0 %v39
    %v126 = vpop.f32.mrb[0].mxu0
    %v127 = vadd.f32 0.0, %v126
    %v128 = vpop.f32.mrb[0].mxu0
    %129 = vmatprep.mubr.f32.mxu0 0.0
    %130 = vmatmul.mubr.f32.gmra.mrb[0].mxu0 %v40
    %v131 = vpop.f32.mrb[0].mxu0
    %v132 = vadd.f32 0.0, %v131
    %v133 = vpop.f32.mrb[0].mxu0
    %134 = vdwg.mxu0
    %135 = vmatprep.subr.mxu0 0.0
    %136 = vmatpush1.xpose.msra.mxu0 %v127
    %137 = vmatprep.subr.mxu0 0.0
    %138 = vmatpush1.xpose.msra.mxu0 %v132
    %139 = vmatprep.subr.mxu0 0.0
    %140 = vmatpush1.xpose.msra.mxu0 0.0
    %141 = vmatprep.subr.mxu0 0.0
    %142 = vmatpush1.xpose.msra.mxu0 0.0
    %143 = vmatprep.subr.mxu0 0.0
    %144 = vmatpush1.xpose.msra.mxu0 0.0
    %145 = vmatprep.subr.mxu0 0.0
    %146 = vmatpush1.xpose.msra.mxu0 0.0
    %147 = vmatprep.subr.mxu0 0.0
    %148 = vmatpush1.xpose.msra.mxu0 0.0
    %149 = vmatprep.subr.mxu0 0.0
    %150 = vmatpush1.xpose.msra.mxu0 0.0
    %151 = vmatprep.subr.mxu0 0.0
    %152 = vmatpush1.xpose.msra.mxu0 0.0
    %153 = vmatprep.subr.mxu0 0.0
    %154 = vmatpush1.xpose.msra.mxu0 0.0
    %155 = vmatprep.subr.mxu0 0.0
    %156 = vmatpush1.xpose.msra.mxu0 0.0
    %157 = vmatprep.subr.mxu0 0.0
    %158 = vmatpush1.xpose.msra.mxu0 0.0
    %159 = vmatprep.subr.mxu0 0.0
    %160 = vmatpush1.xpose.msra.mxu0 0.0
    %161 = vmatprep.subr.mxu0 0.0
    %162 = vmatpush1.xpose.msra.mxu0 0.0
    %163 = vmatprep.subr.mxu0 0.0
    %164 = vmatpush1.xpose.msra.mxu0 0.0
    %165 = vmatprep.subr.mxu0 0.0
    %166 = vmatpush1.xpose.msra.mxu0 0.0
    %167 = vmatprep.subr.mxu0 0.0
    %168 = vmatpush1.xpose.msra.mxu0 0.0
    %169 = vmatprep.subr.mxu0 0.0
    %170 = vmatpush1.xpose.msra.mxu0 0.0
    %171 = vmatprep.subr.mxu0 0.0
    %172 = vmatpush1.xpose.msra.mxu0 0.0
    %173 = vmatprep.subr.mxu0 0.0
    %174 = vmatpush1.xpose.msra.mxu0 0.0
    %175 = vmatprep.subr.mxu0 0.0
    %176 = vmatpush1.xpose.msra.mxu0 0.0
    %177 = vmatprep.subr.mxu0 0.0
    %178 = vmatpush1.xpose.msra.mxu0 0.0
    %179 = vmatprep.subr.mxu0 0.0
    %180 = vmatpush1.xpose.msra.mxu0 0.0
    %181 = vmatprep.subr.mxu0 0.0
    %182 = vmatpush1.xpose.msra.mxu0 0.0
    %183 = vmatprep.subr.mxu0 0.0
    %184 = vmatpush1.xpose.msra.mxu0 0.0
    %185 = vmatprep.subr.mxu0 0.0
    %186 = vmatpush1.xpose.msra.mxu0 0.0
    %187 = vmatprep.subr.mxu0 0.0
    %188 = vmatpush1.xpose.msra.mxu0 0.0
    %189 = vmatprep.subr.mxu0 0.0
    %190 = vmatpush1.xpose.msra.mxu0 0.0
    %191 = vmatprep.subr.mxu0 0.0
    %192 = vmatpush1.xpose.msra.mxu0 0.0
    %193 = vmatprep.subr.mxu0 0.0
    %194 = vmatpush1.xpose.msra.mxu0 0.0
    %195 = vmatprep.subr.mxu0 0.0
    %196 = vmatpush1.xpose.msra.mxu0 0.0
    %197 = vmatprep.subr.mxu0 0.0
    %198 = vmatpush1.xpose.msra.mxu0 0.0
    %199 = vmatprep.mubr.f32.mxu0 0.0
    %200 = vmatmul.mubr.f32.gmra.mrb[0].mxu0 %v59
    %v201 = vpop.f32.mrb[0].mxu0
    %v202 = vadd.f32 0.0, %v201
    %v203 = vpop.f32.mrb[0].mxu0
    %204 = vdwg.mxu0
    %v205 = vlaneseq
    %v206 = vshrl.u32 %v205, 7
    %v207 = vsub.s32 1, %v206
    %v208 = vrot.slane %v59, %v207
    %v209 = vmul.f32 %v127, %v208
    %v210 = vmul.f32 %v132, %v208
    %211 = vadd.xlane.f32.xlu0 %v209
    %v212 = vpop.xlane.xlu0 %211
    %vm213 = vcmask 1043456
    %v214 = vsel %vm213, %v210, 0.0
    %215 = vadd.xlane.f32.xlu0 %v214
    %v216 = vpop.xlane.xlu0 %215
    %v217 = vlaneseq
    %v218 = vshrl.u32 %v217, 7
    %v219 = vsub.s32 0, %v218
    %v220 = vrot.slane %v202, %v219
    %v221 = vadd.f32 %v212, %v220
    %v222 = vadd.f32 %v216, %v220
    %vm223 = vcmp.gt.f32.partialorder %v221, 0.0
    %vm224 = vcmp.gt.f32.partialorder %v222, 0.0
    %v225 = vmul.f32 %v221, 0.2
    %v226 = vmul.f32 %v222, 0.2
    %v227 = vsel %vm223, %v221, %v225
    %v228 = vsel %vm224, %v222, %v226
    %vm229 = vcmp.gt.f32.partialorder %v41, 0.0
    %vm230 = vcmp.gt.f32.partialorder %v42, 0.0
    %v231 = vsel %vm229, %v227, -1e+30
    %v232 = vsel %vm230, %v228, -1e+30
    %vm233 = vcmask 97280
    %v234 = vsel %vm233, %v231, -inf
    %235 = vmax.xlane.f32.xlu0 %v234
    %v236 = vpop.xlane.xlu0 %235
    %vm237 = vcmask 93184
    %v238 = vsel %vm237, %v232, -inf
    %239 = vmax.xlane.f32.xlu0 %v238
    %v240 = vpop.xlane.xlu0 %239
    %v241 = vsub.f32 %v231, %v236
    %v242 = vsub.f32 %v232, %v240
    %v243 = vmul.f32 %v241, 1.442695
    %v244 = vpow.pop %v243
    %v245 = vmul.f32 %v242, 1.442695
    %v246 = vpow.pop %v245
    %v247 = vmul.f32 %v244, %v41
    %v248 = vmul.f32 %v246, %v42
    %v249 = vsel %vm233, %v247, 0.0
    %250 = vadd.xlane.f32.xlu0 %v249
    %v251 = vpop.xlane.xlu0 %250
    %v252 = vsel %vm237, %v248, 0.0
    %253 = vadd.xlane.f32.xlu0 %v252
    %v254 = vpop.xlane.xlu0 %253
    %vm255 = vcmp.gt.f32.partialorder %v251, 0.0
    %vm256 = vcmp.gt.f32.partialorder %v254, 0.0
    %v257 = vsel %vm255, %v251, 1.0
    %v258 = vsel %vm256, %v254, 1.0
    %v259 = vrcp.pop %v257
    %v260 = vrcp.pop %v258
    %v261 = vmul.f32 %v247, %v259
    %v262 = vmul.f32 %v248, %v260
    %v263 = vlaneseq
    %v264 = vshrl.u32 %v263, 7
    %v265 = vsub.s32 2, %v264
    %v266 = vrot.slane %v59, %v265
    %v268 = vsel %vm233, %v261, 0
    %v271 = vsel %vm233, %v262, 0
    %v274 = vsel %vm213, %v132, 0
    %276 = vmatprep.subr.mxu0 0.0
    %277 = vmatpush1.msra.mxu0 %v127
    %278 = vmatprep.subr.mxu0 0.0
    %279 = vmatpush1.msra.mxu0 %v274
    %280 = vmatprep.subr.mxu0 0.0
    %281 = vmatpush1.msra.mxu0 0.0
    %282 = vmatprep.subr.mxu0 0.0
    %283 = vmatpush1.msra.mxu0 0.0
    %284 = vmatprep.subr.mxu0 0.0
    %285 = vmatpush1.msra.mxu0 0.0
    %286 = vmatprep.subr.mxu0 0.0
    %287 = vmatpush1.msra.mxu0 0.0
    %288 = vmatprep.subr.mxu0 0.0
    %289 = vmatpush1.msra.mxu0 0.0
    %290 = vmatprep.subr.mxu0 0.0
    %291 = vmatpush1.msra.mxu0 0.0
    %292 = vmatprep.subr.mxu0 0.0
    %293 = vmatpush1.msra.mxu0 0.0
    %294 = vmatprep.subr.mxu0 0.0
    %295 = vmatpush1.msra.mxu0 0.0
    %296 = vmatprep.subr.mxu0 0.0
    %297 = vmatpush1.msra.mxu0 0.0
    %298 = vmatprep.subr.mxu0 0.0
    %299 = vmatpush1.msra.mxu0 0.0
    %300 = vmatprep.subr.mxu0 0.0
    %301 = vmatpush1.msra.mxu0 0.0
    %302 = vmatprep.subr.mxu0 0.0
    %303 = vmatpush1.msra.mxu0 0.0
    %304 = vmatprep.subr.mxu0 0.0
    %305 = vmatpush1.msra.mxu0 0.0
    %306 = vmatprep.subr.mxu0 0.0
    %307 = vmatpush1.msra.mxu0 0.0
    %308 = vmatprep.subr.mxu0 0.0
    %309 = vmatpush1.msra.mxu0 0.0
    %310 = vmatprep.subr.mxu0 0.0
    %311 = vmatpush1.msra.mxu0 0.0
    %312 = vmatprep.subr.mxu0 0.0
    %313 = vmatpush1.msra.mxu0 0.0
    %314 = vmatprep.subr.mxu0 0.0
    %315 = vmatpush1.msra.mxu0 0.0
    %316 = vmatprep.subr.mxu0 0.0
    %317 = vmatpush1.msra.mxu0 0.0
    %318 = vmatprep.subr.mxu0 0.0
    %319 = vmatpush1.msra.mxu0 0.0
    %320 = vmatprep.subr.mxu0 0.0
    %321 = vmatpush1.msra.mxu0 0.0
    %322 = vmatprep.subr.mxu0 0.0
    %323 = vmatpush1.msra.mxu0 0.0
    %324 = vmatprep.subr.mxu0 0.0
    %325 = vmatpush1.msra.mxu0 0.0
    %326 = vmatprep.subr.mxu0 0.0
    %327 = vmatpush1.msra.mxu0 0.0
    %328 = vmatprep.subr.mxu0 0.0
    %329 = vmatpush1.msra.mxu0 0.0
    %330 = vmatprep.subr.mxu0 0.0
    %331 = vmatpush1.msra.mxu0 0.0
    %332 = vmatprep.subr.mxu0 0.0
    %333 = vmatpush1.msra.mxu0 0.0
    %334 = vmatprep.subr.mxu0 0.0
    %335 = vmatpush1.msra.mxu0 0.0
    %336 = vmatprep.subr.mxu0 0.0
    %337 = vmatpush1.msra.mxu0 0.0
    %338 = vmatprep.subr.mxu0 0.0
    %339 = vmatpush1.msra.mxu0 0.0
    %340 = vmatprep.mubr.f32.mxu0 0.0
    %341 = vmatmul.mubr.f32.gmra.mrb[0].mxu0 %v268
    %v342 = vpop.f32.mrb[0].mxu0
    %v343 = vadd.f32 %v266, %v342
    %v344 = vpop.f32.mrb[0].mxu0
    %345 = vmatprep.mubr.f32.mxu0 0.0
    %346 = vmatmul.mubr.f32.gmra.mrb[0].mxu0 %v271
    %v347 = vpop.f32.mrb[0].mxu0
    %v348 = vadd.f32 %v266, %v347
    %v349 = vpop.f32.mrb[0].mxu0
    %350 = vdwg.mxu0
    %v351 = vsel %vm213, %v348, 0.0
    %v352 = vadd.f32 %v343, %v351
    %v353 = vrot.slane %v352, 4
    %v354 = vadd.f32 %v352, %v353
    %v355 = vrot.slane %v354, 2
    %v356 = vadd.f32 %v354, %v355
    %v357 = vrot.slane %v356, 1
    %v358 = vadd.f32 %v356, %v357
    %v359 = vrcp.pop 12.0
    %v360 = vmul.f32 %v358, %v359
    %v361 = vsub.f32 %v343, %v360
    %v362 = vsub.f32 %v348, %v360
    %v363 = vmul.f32 %v361, %v361
    %v364 = vmul.f32 %v362, %v362
    %v365 = vsel %vm213, %v364, 0.0
    %v366 = vadd.f32 %v363, %v365
    %v367 = vrot.slane %v366, 4
    %v368 = vadd.f32 %v366, %v367
    %v369 = vrot.slane %v368, 2
    %v370 = vadd.f32 %v368, %v369
    %v371 = vrot.slane %v370, 1
    %v372 = vadd.f32 %v370, %v371
    %v373 = vmul.f32 %v372, %v359
    %v374 = vadd.f32 %v373, 1e-05
    %v375 = vrsqrt.pop %v374
    %v376 = vmul.f32 %v59, %v375
    %v377 = vmul.f32 %v360, %v376
    %v379 = vrot.slane %v377, 7
    %v381 = vsub.f32 %v59, %v379
    %v382 = vlaneseq
    %v383 = vshrl.u32 %v382, 7
    %v384 = vsub.s32 3, %v383
    %v385 = vrot.slane %v376, %v384
    %v386 = vmul.f32 %v343, %v385
    %v387 = vmul.f32 %v348, %v385
    %v388 = vlaneseq
    %v389 = vshrl.u32 %v388, 7
    %v390 = vsub.s32 4, %v389
    %v391 = vrot.slane %v381, %v390
    %v392 = vadd.f32 %v386, %v391
    %v393 = vadd.f32 %v387, %v391
    %v394 = vmax.f32 %v392, 0.0
    %v395 = vmax.f32 %v393, 0.0
    %s396 = scalar_lea.vmem [#allocation2], 128
    %v397 = vld [vmem:[%s396] sm:$0xff]
    %v398 = vld [vmem:[%s396 + $0x8] sm:$0xff]
    %v399 = vld [vmem:[%s396 + $0x10] sm:$0xff]
    %v400 = vld [vmem:[%s396 + $0x18] sm:$0xff]
    %v401 = vld [vmem:[%s396 + $0x20] sm:$0xff]
    %v402 = vld [vmem:[%s396 + $0x28] sm:$0xff]
    %v403 = vld [vmem:[%s396 + $0x30] sm:$0xff]
    %v404 = vld [vmem:[%s396 + $0x38] sm:$0xff]
    %v405 = vld [vmem:[%s396 + $0x40] sm:$0xff]
    %v406 = vld [vmem:[%s396 + $0x48] sm:$0xff]
    %v407 = vld [vmem:[%s396 + $0x50] sm:$0xff]
    %v408 = vld [vmem:[%s396 + $0x58] sm:$0xff]
    %v409 = vld [vmem:[%s396 + $0x60] sm:$0xff]
    %v410 = vld [vmem:[%s396 + $0x68] sm:$0xff]
    %v411 = vld [vmem:[%s396 + $0x70] sm:$0xff]
    %v412 = vld [vmem:[%s396 + $0x78] sm:$0xff]
    %s413 = scalar_lea.vmem %s3, 8
    %v414 = vld [vmem:[%s413] sm:$0x1f]
    %415 = vmatprep.subr.mxu0 0.0
    %416 = vmatpush1.msra.mxu0 %v397
    %417 = vmatprep.subr.mxu0 0.0
    %418 = vmatpush1.msra.mxu0 %v398
    %419 = vmatprep.subr.mxu0 0.0
    %420 = vmatpush1.msra.mxu0 %v399
    %421 = vmatprep.subr.mxu0 0.0
    %422 = vmatpush1.msra.mxu0 %v400
    %423 = vmatprep.subr.mxu0 0.0
    %424 = vmatpush1.msra.mxu0 %v401
    %425 = vmatprep.subr.mxu0 0.0
    %426 = vmatpush1.msra.mxu0 %v402
    %427 = vmatprep.subr.mxu0 0.0
    %428 = vmatpush1.msra.mxu0 %v403
    %429 = vmatprep.subr.mxu0 0.0
    %430 = vmatpush1.msra.mxu0 %v404
    %431 = vmatprep.subr.mxu0 0.0
    %432 = vmatpush1.msra.mxu0 %v405
    %433 = vmatprep.subr.mxu0 0.0
    %434 = vmatpush1.msra.mxu0 %v406
    %435 = vmatprep.subr.mxu0 0.0
    %436 = vmatpush1.msra.mxu0 %v407
    %437 = vmatprep.subr.mxu0 0.0
    %438 = vmatpush1.msra.mxu0 %v408
    %439 = vmatprep.subr.mxu0 0.0
    %440 = vmatpush1.msra.mxu0 %v409
    %441 = vmatprep.subr.mxu0 0.0
    %442 = vmatpush1.msra.mxu0 %v410
    %443 = vmatprep.subr.mxu0 0.0
    %444 = vmatpush1.msra.mxu0 %v411
    %445 = vmatprep.subr.mxu0 0.0
    %446 = vmatpush1.msra.mxu0 %v412
    %447 = vmatprep.subr.mxu0 0.0
    %448 = vmatpush1.msra.mxu0 0.0
    %449 = vmatprep.subr.mxu0 0.0
    %450 = vmatpush1.msra.mxu0 0.0
    %451 = vmatprep.subr.mxu0 0.0
    %452 = vmatpush1.msra.mxu0 0.0
    %453 = vmatprep.subr.mxu0 0.0
    %454 = vmatpush1.msra.mxu0 0.0
    %455 = vmatprep.subr.mxu0 0.0
    %456 = vmatpush1.msra.mxu0 0.0
    %457 = vmatprep.subr.mxu0 0.0
    %458 = vmatpush1.msra.mxu0 0.0
    %459 = vmatprep.subr.mxu0 0.0
    %460 = vmatpush1.msra.mxu0 0.0
    %461 = vmatprep.subr.mxu0 0.0
    %462 = vmatpush1.msra.mxu0 0.0
    %463 = vmatprep.subr.mxu0 0.0
    %464 = vmatpush1.msra.mxu0 0.0
    %465 = vmatprep.subr.mxu0 0.0
    %466 = vmatpush1.msra.mxu0 0.0
    %467 = vmatprep.subr.mxu0 0.0
    %468 = vmatpush1.msra.mxu0 0.0
    %469 = vmatprep.subr.mxu0 0.0
    %470 = vmatpush1.msra.mxu0 0.0
    %471 = vmatprep.subr.mxu0 0.0
    %472 = vmatpush1.msra.mxu0 0.0
    %473 = vmatprep.subr.mxu0 0.0
    %474 = vmatpush1.msra.mxu0 0.0
    %475 = vmatprep.subr.mxu0 0.0
    %476 = vmatpush1.msra.mxu0 0.0
    %477 = vmatprep.subr.mxu0 0.0
    %478 = vmatpush1.msra.mxu0 0.0
    %479 = vmatprep.mubr.f32.mxu0 0.0
    %480 = vmatmul.mubr.f32.gmra.mrb[0].mxu0 %v394
    %v481 = vpop.f32.mrb[0].mxu0
    %v482 = vadd.f32 0.0, %v481
    %v483 = vpop.f32.mrb[0].mxu0
    %484 = vmatprep.mubr.f32.mxu0 0.0
    %485 = vmatmul.mubr.f32.gmra.mrb[0].mxu0 %v395
    %v486 = vpop.f32.mrb[0].mxu0
    %v487 = vadd.f32 0.0, %v486
    %v488 = vpop.f32.mrb[0].mxu0
    %489 = vdwg.mxu0
    %490 = vmatprep.subr.mxu0 0.0
    %491 = vmatpush1.xpose.msra.mxu0 %v482
    %492 = vmatprep.subr.mxu0 0.0
    %493 = vmatpush1.xpose.msra.mxu0 %v487
    %494 = vmatprep.subr.mxu0 0.0
    %495 = vmatpush1.xpose.msra.mxu0 0.0
    %496 = vmatprep.subr.mxu0 0.0
    %497 = vmatpush1.xpose.msra.mxu0 0.0
    %498 = vmatprep.subr.mxu0 0.0
    %499 = vmatpush1.xpose.msra.mxu0 0.0
    %500 = vmatprep.subr.mxu0 0.0
    %501 = vmatpush1.xpose.msra.mxu0 0.0
    %502 = vmatprep.subr.mxu0 0.0
    %503 = vmatpush1.xpose.msra.mxu0 0.0
    %504 = vmatprep.subr.mxu0 0.0
    %505 = vmatpush1.xpose.msra.mxu0 0.0
    %506 = vmatprep.subr.mxu0 0.0
    %507 = vmatpush1.xpose.msra.mxu0 0.0
    %508 = vmatprep.subr.mxu0 0.0
    %509 = vmatpush1.xpose.msra.mxu0 0.0
    %510 = vmatprep.subr.mxu0 0.0
    %511 = vmatpush1.xpose.msra.mxu0 0.0
    %512 = vmatprep.subr.mxu0 0.0
    %513 = vmatpush1.xpose.msra.mxu0 0.0
    %514 = vmatprep.subr.mxu0 0.0
    %515 = vmatpush1.xpose.msra.mxu0 0.0
    %516 = vmatprep.subr.mxu0 0.0
    %517 = vmatpush1.xpose.msra.mxu0 0.0
    %518 = vmatprep.subr.mxu0 0.0
    %519 = vmatpush1.xpose.msra.mxu0 0.0
    %520 = vmatprep.subr.mxu0 0.0
    %521 = vmatpush1.xpose.msra.mxu0 0.0
    %522 = vmatprep.subr.mxu0 0.0
    %523 = vmatpush1.xpose.msra.mxu0 0.0
    %524 = vmatprep.subr.mxu0 0.0
    %525 = vmatpush1.xpose.msra.mxu0 0.0
    %526 = vmatprep.subr.mxu0 0.0
    %527 = vmatpush1.xpose.msra.mxu0 0.0
    %528 = vmatprep.subr.mxu0 0.0
    %529 = vmatpush1.xpose.msra.mxu0 0.0
    %530 = vmatprep.subr.mxu0 0.0
    %531 = vmatpush1.xpose.msra.mxu0 0.0
    %532 = vmatprep.subr.mxu0 0.0
    %533 = vmatpush1.xpose.msra.mxu0 0.0
    %534 = vmatprep.subr.mxu0 0.0
    %535 = vmatpush1.xpose.msra.mxu0 0.0
    %536 = vmatprep.subr.mxu0 0.0
    %537 = vmatpush1.xpose.msra.mxu0 0.0
    %538 = vmatprep.subr.mxu0 0.0
    %539 = vmatpush1.xpose.msra.mxu0 0.0
    %540 = vmatprep.subr.mxu0 0.0
    %541 = vmatpush1.xpose.msra.mxu0 0.0
    %542 = vmatprep.subr.mxu0 0.0
    %543 = vmatpush1.xpose.msra.mxu0 0.0
    %544 = vmatprep.subr.mxu0 0.0
    %545 = vmatpush1.xpose.msra.mxu0 0.0
    %546 = vmatprep.subr.mxu0 0.0
    %547 = vmatpush1.xpose.msra.mxu0 0.0
    %548 = vmatprep.subr.mxu0 0.0
    %549 = vmatpush1.xpose.msra.mxu0 0.0
    %550 = vmatprep.subr.mxu0 0.0
    %551 = vmatpush1.xpose.msra.mxu0 0.0
    %552 = vmatprep.subr.mxu0 0.0
    %553 = vmatpush1.xpose.msra.mxu0 0.0
    %554 = vmatprep.mubr.f32.mxu0 0.0
    %555 = vmatmul.mubr.f32.gmra.mrb[0].mxu0 %v414
    %v556 = vpop.f32.mrb[0].mxu0
    %v557 = vadd.f32 0.0, %v556
    %v558 = vpop.f32.mrb[0].mxu0
    %559 = vdwg.mxu0
    %v560 = vlaneseq
    %v561 = vshrl.u32 %v560, 7
    %v562 = vsub.s32 1, %v561
    %v563 = vrot.slane %v414, %v562
    %v564 = vmul.f32 %v482, %v563
    %v565 = vmul.f32 %v487, %v563
    %566 = vadd.xlane.f32.xlu0 %v564
    %v567 = vpop.xlane.xlu0 %566
    %v568 = vsel %vm213, %v565, 0.0
    %569 = vadd.xlane.f32.xlu0 %v568
    %v570 = vpop.xlane.xlu0 %569
    %v571 = vlaneseq
    %v572 = vshrl.u32 %v571, 7
    %v573 = vsub.s32 0, %v572
    %v574 = vrot.slane %v557, %v573
    %v575 = vadd.f32 %v567, %v574
    %v576 = vadd.f32 %v570, %v574
    %vm577 = vcmp.gt.f32.partialorder %v575, 0.0
    %vm578 = vcmp.gt.f32.partialorder %v576, 0.0
    %v579 = vmul.f32 %v575, 0.2
    %v580 = vmul.f32 %v576, 0.2
    %v581 = vsel %vm577, %v575, %v579
    %v582 = vsel %vm578, %v576, %v580
    %v583 = vsel %vm229, %v581, -1e+30
    %v584 = vsel %vm230, %v582, -1e+30
    %v585 = vsel %vm233, %v583, -inf
    %586 = vmax.xlane.f32.xlu0 %v585
    %v587 = vpop.xlane.xlu0 %586
    %v588 = vsel %vm237, %v584, -inf
    %589 = vmax.xlane.f32.xlu0 %v588
    %v590 = vpop.xlane.xlu0 %589
    %v591 = vsub.f32 %v583, %v587
    %v592 = vsub.f32 %v584, %v590
    %v593 = vmul.f32 %v591, 1.442695
    %v594 = vpow.pop %v593
    %v595 = vmul.f32 %v592, 1.442695
    %v596 = vpow.pop %v595
    %v597 = vmul.f32 %v594, %v41
    %v598 = vmul.f32 %v596, %v42
    %v599 = vsel %vm233, %v597, 0.0
    %600 = vadd.xlane.f32.xlu0 %v599
    %v601 = vpop.xlane.xlu0 %600
    %v602 = vsel %vm237, %v598, 0.0
    %603 = vadd.xlane.f32.xlu0 %v602
    %v604 = vpop.xlane.xlu0 %603
    %vm605 = vcmp.gt.f32.partialorder %v601, 0.0
    %vm606 = vcmp.gt.f32.partialorder %v604, 0.0
    %v607 = vsel %vm605, %v601, 1.0
    %v608 = vsel %vm606, %v604, 1.0
    %v609 = vrcp.pop %v607
    %v610 = vrcp.pop %v608
    %v611 = vmul.f32 %v597, %v609
    %v612 = vmul.f32 %v598, %v610
    %v613 = vlaneseq
    %v614 = vshrl.u32 %v613, 7
    %v615 = vsub.s32 2, %v614
    %v616 = vrot.slane %v414, %v615
    %v618 = vsel %vm233, %v611, 0
    %v621 = vsel %vm233, %v612, 0
    %v624 = vsel %vm213, %v487, 0
    %626 = vmatprep.subr.mxu0 0.0
    %627 = vmatpush1.msra.mxu0 %v482
    %628 = vmatprep.subr.mxu0 0.0
    %629 = vmatpush1.msra.mxu0 %v624
    %630 = vmatprep.subr.mxu0 0.0
    %631 = vmatpush1.msra.mxu0 0.0
    %632 = vmatprep.subr.mxu0 0.0
    %633 = vmatpush1.msra.mxu0 0.0
    %634 = vmatprep.subr.mxu0 0.0
    %635 = vmatpush1.msra.mxu0 0.0
    %636 = vmatprep.subr.mxu0 0.0
    %637 = vmatpush1.msra.mxu0 0.0
    %638 = vmatprep.subr.mxu0 0.0
    %639 = vmatpush1.msra.mxu0 0.0
    %640 = vmatprep.subr.mxu0 0.0
    %641 = vmatpush1.msra.mxu0 0.0
    %642 = vmatprep.subr.mxu0 0.0
    %643 = vmatpush1.msra.mxu0 0.0
    %644 = vmatprep.subr.mxu0 0.0
    %645 = vmatpush1.msra.mxu0 0.0
    %646 = vmatprep.subr.mxu0 0.0
    %647 = vmatpush1.msra.mxu0 0.0
    %648 = vmatprep.subr.mxu0 0.0
    %649 = vmatpush1.msra.mxu0 0.0
    %650 = vmatprep.subr.mxu0 0.0
    %651 = vmatpush1.msra.mxu0 0.0
    %652 = vmatprep.subr.mxu0 0.0
    %653 = vmatpush1.msra.mxu0 0.0
    %654 = vmatprep.subr.mxu0 0.0
    %655 = vmatpush1.msra.mxu0 0.0
    %656 = vmatprep.subr.mxu0 0.0
    %657 = vmatpush1.msra.mxu0 0.0
    %658 = vmatprep.subr.mxu0 0.0
    %659 = vmatpush1.msra.mxu0 0.0
    %660 = vmatprep.subr.mxu0 0.0
    %661 = vmatpush1.msra.mxu0 0.0
    %662 = vmatprep.subr.mxu0 0.0
    %663 = vmatpush1.msra.mxu0 0.0
    %664 = vmatprep.subr.mxu0 0.0
    %665 = vmatpush1.msra.mxu0 0.0
    %666 = vmatprep.subr.mxu0 0.0
    %667 = vmatpush1.msra.mxu0 0.0
    %668 = vmatprep.subr.mxu0 0.0
    %669 = vmatpush1.msra.mxu0 0.0
    %670 = vmatprep.subr.mxu0 0.0
    %671 = vmatpush1.msra.mxu0 0.0
    %672 = vmatprep.subr.mxu0 0.0
    %673 = vmatpush1.msra.mxu0 0.0
    %674 = vmatprep.subr.mxu0 0.0
    %675 = vmatpush1.msra.mxu0 0.0
    %676 = vmatprep.subr.mxu0 0.0
    %677 = vmatpush1.msra.mxu0 0.0
    %678 = vmatprep.subr.mxu0 0.0
    %679 = vmatpush1.msra.mxu0 0.0
    %680 = vmatprep.subr.mxu0 0.0
    %681 = vmatpush1.msra.mxu0 0.0
    %682 = vmatprep.subr.mxu0 0.0
    %683 = vmatpush1.msra.mxu0 0.0
    %684 = vmatprep.subr.mxu0 0.0
    %685 = vmatpush1.msra.mxu0 0.0
    %686 = vmatprep.subr.mxu0 0.0
    %687 = vmatpush1.msra.mxu0 0.0
    %688 = vmatprep.subr.mxu0 0.0
    %689 = vmatpush1.msra.mxu0 0.0
    %690 = vmatprep.mubr.f32.mxu0 0.0
    %691 = vmatmul.mubr.f32.gmra.mrb[0].mxu0 %v618
    %v692 = vpop.f32.mrb[0].mxu0
    %v693 = vadd.f32 %v616, %v692
    %v694 = vpop.f32.mrb[0].mxu0
    %695 = vmatprep.mubr.f32.mxu0 0.0
    %696 = vmatmul.mubr.f32.gmra.mrb[0].mxu0 %v621
    %v697 = vpop.f32.mrb[0].mxu0
    %v698 = vadd.f32 %v616, %v697
    %v699 = vpop.f32.mrb[0].mxu0
    %700 = vdwg.mxu0
    %v701 = vsel %vm213, %v698, 0.0
    %v702 = vadd.f32 %v693, %v701
    %v703 = vrot.slane %v702, 4
    %v704 = vadd.f32 %v702, %v703
    %v705 = vrot.slane %v704, 2
    %v706 = vadd.f32 %v704, %v705
    %v707 = vrot.slane %v706, 1
    %v708 = vadd.f32 %v706, %v707
    %v709 = vmul.f32 %v708, %v359
    %v710 = vsub.f32 %v693, %v709
    %v711 = vsub.f32 %v698, %v709
    %v712 = vmul.f32 %v710, %v710
    %v713 = vmul.f32 %v711, %v711
    %v714 = vsel %vm213, %v713, 0.0
    %v715 = vadd.f32 %v712, %v714
    %v716 = vrot.slane %v715, 4
    %v717 = vadd.f32 %v715, %v716
    %v718 = vrot.slane %v717, 2
    %v719 = vadd.f32 %v717, %v718
    %v720 = vrot.slane %v719, 1
    %v721 = vadd.f32 %v719, %v720
    %v722 = vmul.f32 %v721, %v359
    %v723 = vadd.f32 %v722, 1e-05
    %v724 = vrsqrt.pop %v723
    %v725 = vmul.f32 %v414, %v724
    %v726 = vmul.f32 %v709, %v725
    %v728 = vrot.slane %v726, 7
    %v730 = vsub.f32 %v414, %v728
    %v731 = vlaneseq
    %v732 = vshrl.u32 %v731, 7
    %v733 = vsub.s32 3, %v732
    %v734 = vrot.slane %v725, %v733
    %v735 = vmul.f32 %v693, %v734
    %v736 = vmul.f32 %v698, %v734
    %v737 = vlaneseq
    %v738 = vshrl.u32 %v737, 7
    %v739 = vsub.s32 4, %v738
    %v740 = vrot.slane %v730, %v739
    %v741 = vadd.f32 %v735, %v740
    %v742 = vadd.f32 %v736, %v740
    %v743 = vmax.f32 %v741, 0.0
    %v744 = vmax.f32 %v742, 0.0
    %s745 = scalar_lea.vmem [#allocation2], 256
    %v746 = vld [vmem:[%s745] sm:$0xff]
    %v747 = vld [vmem:[%s745 + $0x8] sm:$0xff]
    %v748 = vld [vmem:[%s745 + $0x10] sm:$0xff]
    %v749 = vld [vmem:[%s745 + $0x18] sm:$0xff]
    %v750 = vld [vmem:[%s745 + $0x20] sm:$0xff]
    %v751 = vld [vmem:[%s745 + $0x28] sm:$0xff]
    %v752 = vld [vmem:[%s745 + $0x30] sm:$0xff]
    %v753 = vld [vmem:[%s745 + $0x38] sm:$0xff]
    %v754 = vld [vmem:[%s745 + $0x40] sm:$0xff]
    %v755 = vld [vmem:[%s745 + $0x48] sm:$0xff]
    %v756 = vld [vmem:[%s745 + $0x50] sm:$0xff]
    %v757 = vld [vmem:[%s745 + $0x58] sm:$0xff]
    %v758 = vld [vmem:[%s745 + $0x60] sm:$0xff]
    %v759 = vld [vmem:[%s745 + $0x68] sm:$0xff]
    %v760 = vld [vmem:[%s745 + $0x70] sm:$0xff]
    %v761 = vld [vmem:[%s745 + $0x78] sm:$0xff]
    %s762 = scalar_lea.vmem %s3, 16
    %v763 = vld [vmem:[%s762] sm:$0x1f]
    %764 = vmatprep.subr.mxu0 0.0
    %765 = vmatpush1.msra.mxu0 %v746
    %766 = vmatprep.subr.mxu0 0.0
    %767 = vmatpush1.msra.mxu0 %v747
    %768 = vmatprep.subr.mxu0 0.0
    %769 = vmatpush1.msra.mxu0 %v748
    %770 = vmatprep.subr.mxu0 0.0
    %771 = vmatpush1.msra.mxu0 %v749
    %772 = vmatprep.subr.mxu0 0.0
    %773 = vmatpush1.msra.mxu0 %v750
    %774 = vmatprep.subr.mxu0 0.0
    %775 = vmatpush1.msra.mxu0 %v751
    %776 = vmatprep.subr.mxu0 0.0
    %777 = vmatpush1.msra.mxu0 %v752
    %778 = vmatprep.subr.mxu0 0.0
    %779 = vmatpush1.msra.mxu0 %v753
    %780 = vmatprep.subr.mxu0 0.0
    %781 = vmatpush1.msra.mxu0 %v754
    %782 = vmatprep.subr.mxu0 0.0
    %783 = vmatpush1.msra.mxu0 %v755
    %784 = vmatprep.subr.mxu0 0.0
    %785 = vmatpush1.msra.mxu0 %v756
    %786 = vmatprep.subr.mxu0 0.0
    %787 = vmatpush1.msra.mxu0 %v757
    %788 = vmatprep.subr.mxu0 0.0
    %789 = vmatpush1.msra.mxu0 %v758
    %790 = vmatprep.subr.mxu0 0.0
    %791 = vmatpush1.msra.mxu0 %v759
    %792 = vmatprep.subr.mxu0 0.0
    %793 = vmatpush1.msra.mxu0 %v760
    %794 = vmatprep.subr.mxu0 0.0
    %795 = vmatpush1.msra.mxu0 %v761
    %796 = vmatprep.subr.mxu0 0.0
    %797 = vmatpush1.msra.mxu0 0.0
    %798 = vmatprep.subr.mxu0 0.0
    %799 = vmatpush1.msra.mxu0 0.0
    %800 = vmatprep.subr.mxu0 0.0
    %801 = vmatpush1.msra.mxu0 0.0
    %802 = vmatprep.subr.mxu0 0.0
    %803 = vmatpush1.msra.mxu0 0.0
    %804 = vmatprep.subr.mxu0 0.0
    %805 = vmatpush1.msra.mxu0 0.0
    %806 = vmatprep.subr.mxu0 0.0
    %807 = vmatpush1.msra.mxu0 0.0
    %808 = vmatprep.subr.mxu0 0.0
    %809 = vmatpush1.msra.mxu0 0.0
    %810 = vmatprep.subr.mxu0 0.0
    %811 = vmatpush1.msra.mxu0 0.0
    %812 = vmatprep.subr.mxu0 0.0
    %813 = vmatpush1.msra.mxu0 0.0
    %814 = vmatprep.subr.mxu0 0.0
    %815 = vmatpush1.msra.mxu0 0.0
    %816 = vmatprep.subr.mxu0 0.0
    %817 = vmatpush1.msra.mxu0 0.0
    %818 = vmatprep.subr.mxu0 0.0
    %819 = vmatpush1.msra.mxu0 0.0
    %820 = vmatprep.subr.mxu0 0.0
    %821 = vmatpush1.msra.mxu0 0.0
    %822 = vmatprep.subr.mxu0 0.0
    %823 = vmatpush1.msra.mxu0 0.0
    %824 = vmatprep.subr.mxu0 0.0
    %825 = vmatpush1.msra.mxu0 0.0
    %826 = vmatprep.subr.mxu0 0.0
    %827 = vmatpush1.msra.mxu0 0.0
    %828 = vmatprep.mubr.f32.mxu0 0.0
    %829 = vmatmul.mubr.f32.gmra.mrb[0].mxu0 %v743
    %v830 = vpop.f32.mrb[0].mxu0
    %v831 = vadd.f32 0.0, %v830
    %v832 = vpop.f32.mrb[0].mxu0
    %833 = vmatprep.mubr.f32.mxu0 0.0
    %834 = vmatmul.mubr.f32.gmra.mrb[0].mxu0 %v744
    %v835 = vpop.f32.mrb[0].mxu0
    %v836 = vadd.f32 0.0, %v835
    %v837 = vpop.f32.mrb[0].mxu0
    %838 = vdwg.mxu0
    %839 = vmatprep.subr.mxu0 0.0
    %840 = vmatpush1.xpose.msra.mxu0 %v831
    %841 = vmatprep.subr.mxu0 0.0
    %842 = vmatpush1.xpose.msra.mxu0 %v836
    %843 = vmatprep.subr.mxu0 0.0
    %844 = vmatpush1.xpose.msra.mxu0 0.0
    %845 = vmatprep.subr.mxu0 0.0
    %846 = vmatpush1.xpose.msra.mxu0 0.0
    %847 = vmatprep.subr.mxu0 0.0
    %848 = vmatpush1.xpose.msra.mxu0 0.0
    %849 = vmatprep.subr.mxu0 0.0
    %850 = vmatpush1.xpose.msra.mxu0 0.0
    %851 = vmatprep.subr.mxu0 0.0
    %852 = vmatpush1.xpose.msra.mxu0 0.0
    %853 = vmatprep.subr.mxu0 0.0
    %854 = vmatpush1.xpose.msra.mxu0 0.0
    %855 = vmatprep.subr.mxu0 0.0
    %856 = vmatpush1.xpose.msra.mxu0 0.0
    %857 = vmatprep.subr.mxu0 0.0
    %858 = vmatpush1.xpose.msra.mxu0 0.0
    %859 = vmatprep.subr.mxu0 0.0
    %860 = vmatpush1.xpose.msra.mxu0 0.0
    %861 = vmatprep.subr.mxu0 0.0
    %862 = vmatpush1.xpose.msra.mxu0 0.0
    %863 = vmatprep.subr.mxu0 0.0
    %864 = vmatpush1.xpose.msra.mxu0 0.0
    %865 = vmatprep.subr.mxu0 0.0
    %866 = vmatpush1.xpose.msra.mxu0 0.0
    %867 = vmatprep.subr.mxu0 0.0
    %868 = vmatpush1.xpose.msra.mxu0 0.0
    %869 = vmatprep.subr.mxu0 0.0
    %870 = vmatpush1.xpose.msra.mxu0 0.0
    %871 = vmatprep.subr.mxu0 0.0
    %872 = vmatpush1.xpose.msra.mxu0 0.0
    %873 = vmatprep.subr.mxu0 0.0
    %874 = vmatpush1.xpose.msra.mxu0 0.0
    %875 = vmatprep.subr.mxu0 0.0
    %876 = vmatpush1.xpose.msra.mxu0 0.0
    %877 = vmatprep.subr.mxu0 0.0
    %878 = vmatpush1.xpose.msra.mxu0 0.0
    %879 = vmatprep.subr.mxu0 0.0
    %880 = vmatpush1.xpose.msra.mxu0 0.0
    %881 = vmatprep.subr.mxu0 0.0
    %882 = vmatpush1.xpose.msra.mxu0 0.0
    %883 = vmatprep.subr.mxu0 0.0
    %884 = vmatpush1.xpose.msra.mxu0 0.0
    %885 = vmatprep.subr.mxu0 0.0
    %886 = vmatpush1.xpose.msra.mxu0 0.0
    %887 = vmatprep.subr.mxu0 0.0
    %888 = vmatpush1.xpose.msra.mxu0 0.0
    %889 = vmatprep.subr.mxu0 0.0
    %890 = vmatpush1.xpose.msra.mxu0 0.0
    %891 = vmatprep.subr.mxu0 0.0
    %892 = vmatpush1.xpose.msra.mxu0 0.0
    %893 = vmatprep.subr.mxu0 0.0
    %894 = vmatpush1.xpose.msra.mxu0 0.0
    %895 = vmatprep.subr.mxu0 0.0
    %896 = vmatpush1.xpose.msra.mxu0 0.0
    %897 = vmatprep.subr.mxu0 0.0
    %898 = vmatpush1.xpose.msra.mxu0 0.0
    %899 = vmatprep.subr.mxu0 0.0
    %900 = vmatpush1.xpose.msra.mxu0 0.0
    %901 = vmatprep.subr.mxu0 0.0
    %902 = vmatpush1.xpose.msra.mxu0 0.0
    %903 = vmatprep.mubr.f32.mxu0 0.0
    %904 = vmatmul.mubr.f32.gmra.mrb[0].mxu0 %v763
    %v905 = vpop.f32.mrb[0].mxu0
    %v906 = vadd.f32 0.0, %v905
    %v907 = vpop.f32.mrb[0].mxu0
    %908 = vdwg.mxu0
    %v909 = vlaneseq
    %v910 = vshrl.u32 %v909, 7
    %v911 = vsub.s32 1, %v910
    %v912 = vrot.slane %v763, %v911
    %v913 = vmul.f32 %v831, %v912
    %v914 = vmul.f32 %v836, %v912
    %915 = vadd.xlane.f32.xlu0 %v913
    %v916 = vpop.xlane.xlu0 %915
    %v917 = vsel %vm213, %v914, 0.0
    %918 = vadd.xlane.f32.xlu0 %v917
    %v919 = vpop.xlane.xlu0 %918
    %v920 = vlaneseq
    %v921 = vshrl.u32 %v920, 7
    %v922 = vsub.s32 0, %v921
    %v923 = vrot.slane %v906, %v922
    %v924 = vadd.f32 %v916, %v923
    %v925 = vadd.f32 %v919, %v923
    %vm926 = vcmp.gt.f32.partialorder %v924, 0.0
    %vm927 = vcmp.gt.f32.partialorder %v925, 0.0
    %v928 = vmul.f32 %v924, 0.2
    %v929 = vmul.f32 %v925, 0.2
    %v930 = vsel %vm926, %v924, %v928
    %v931 = vsel %vm927, %v925, %v929
    %v932 = vsel %vm229, %v930, -1e+30
    %v933 = vsel %vm230, %v931, -1e+30
    %v934 = vsel %vm233, %v932, -inf
    %935 = vmax.xlane.f32.xlu0 %v934
    %v936 = vpop.xlane.xlu0 %935
    %v937 = vsel %vm237, %v933, -inf
    %938 = vmax.xlane.f32.xlu0 %v937
    %v939 = vpop.xlane.xlu0 %938
    %v940 = vsub.f32 %v932, %v936
    %v941 = vsub.f32 %v933, %v939
    %v942 = vmul.f32 %v940, 1.442695
    %v943 = vpow.pop %v942
    %v944 = vmul.f32 %v941, 1.442695
    %v945 = vpow.pop %v944
    %v946 = vmul.f32 %v943, %v41
    %v947 = vmul.f32 %v945, %v42
    %v948 = vsel %vm233, %v946, 0.0
    %949 = vadd.xlane.f32.xlu0 %v948
    %v950 = vpop.xlane.xlu0 %949
    %v951 = vsel %vm237, %v947, 0.0
    %952 = vadd.xlane.f32.xlu0 %v951
    %v953 = vpop.xlane.xlu0 %952
    %vm954 = vcmp.gt.f32.partialorder %v950, 0.0
    %vm955 = vcmp.gt.f32.partialorder %v953, 0.0
    %v956 = vsel %vm954, %v950, 1.0
    %v957 = vsel %vm955, %v953, 1.0
    %v958 = vrcp.pop %v956
    %v959 = vrcp.pop %v957
    %v960 = vmul.f32 %v946, %v958
    %v961 = vmul.f32 %v947, %v959
    %v962 = vlaneseq
    %v963 = vshrl.u32 %v962, 7
    %v964 = vsub.s32 2, %v963
    %v965 = vrot.slane %v763, %v964
    %v967 = vsel %vm233, %v960, 0
    %v970 = vsel %vm233, %v961, 0
    %v973 = vsel %vm213, %v836, 0
    %975 = vmatprep.subr.mxu0 0.0
    %976 = vmatpush1.msra.mxu0 %v831
    %977 = vmatprep.subr.mxu0 0.0
    %978 = vmatpush1.msra.mxu0 %v973
    %979 = vmatprep.subr.mxu0 0.0
    %980 = vmatpush1.msra.mxu0 0.0
    %981 = vmatprep.subr.mxu0 0.0
    %982 = vmatpush1.msra.mxu0 0.0
    %983 = vmatprep.subr.mxu0 0.0
    %984 = vmatpush1.msra.mxu0 0.0
    %985 = vmatprep.subr.mxu0 0.0
    %986 = vmatpush1.msra.mxu0 0.0
    %987 = vmatprep.subr.mxu0 0.0
    %988 = vmatpush1.msra.mxu0 0.0
    %989 = vmatprep.subr.mxu0 0.0
    %990 = vmatpush1.msra.mxu0 0.0
    %991 = vmatprep.subr.mxu0 0.0
    %992 = vmatpush1.msra.mxu0 0.0
    %993 = vmatprep.subr.mxu0 0.0
    %994 = vmatpush1.msra.mxu0 0.0
    %995 = vmatprep.subr.mxu0 0.0
    %996 = vmatpush1.msra.mxu0 0.0
    %997 = vmatprep.subr.mxu0 0.0
    %998 = vmatpush1.msra.mxu0 0.0
    %999 = vmatprep.subr.mxu0 0.0
    %1000 = vmatpush1.msra.mxu0 0.0
    %1001 = vmatprep.subr.mxu0 0.0
    %1002 = vmatpush1.msra.mxu0 0.0
    %1003 = vmatprep.subr.mxu0 0.0
    %1004 = vmatpush1.msra.mxu0 0.0
    %1005 = vmatprep.subr.mxu0 0.0
    %1006 = vmatpush1.msra.mxu0 0.0
    %1007 = vmatprep.subr.mxu0 0.0
    %1008 = vmatpush1.msra.mxu0 0.0
    %1009 = vmatprep.subr.mxu0 0.0
    %1010 = vmatpush1.msra.mxu0 0.0
    %1011 = vmatprep.subr.mxu0 0.0
    %1012 = vmatpush1.msra.mxu0 0.0
    %1013 = vmatprep.subr.mxu0 0.0
    %1014 = vmatpush1.msra.mxu0 0.0
    %1015 = vmatprep.subr.mxu0 0.0
    %1016 = vmatpush1.msra.mxu0 0.0
    %1017 = vmatprep.subr.mxu0 0.0
    %1018 = vmatpush1.msra.mxu0 0.0
    %1019 = vmatprep.subr.mxu0 0.0
    %1020 = vmatpush1.msra.mxu0 0.0
    %1021 = vmatprep.subr.mxu0 0.0
    %1022 = vmatpush1.msra.mxu0 0.0
    %1023 = vmatprep.subr.mxu0 0.0
    %1024 = vmatpush1.msra.mxu0 0.0
    %1025 = vmatprep.subr.mxu0 0.0
    %1026 = vmatpush1.msra.mxu0 0.0
    %1027 = vmatprep.subr.mxu0 0.0
    %1028 = vmatpush1.msra.mxu0 0.0
    %1029 = vmatprep.subr.mxu0 0.0
    %1030 = vmatpush1.msra.mxu0 0.0
    %1031 = vmatprep.subr.mxu0 0.0
    %1032 = vmatpush1.msra.mxu0 0.0
    %1033 = vmatprep.subr.mxu0 0.0
    %1034 = vmatpush1.msra.mxu0 0.0
    %1035 = vmatprep.subr.mxu0 0.0
    %1036 = vmatpush1.msra.mxu0 0.0
    %1037 = vmatprep.subr.mxu0 0.0
    %1038 = vmatpush1.msra.mxu0 0.0
    %1039 = vmatprep.mubr.f32.mxu0 0.0
    %1040 = vmatmul.mubr.f32.gmra.mrb[0].mxu0 %v967
    %v1041 = vpop.f32.mrb[0].mxu0
    %v1042 = vadd.f32 %v965, %v1041
    %v1043 = vpop.f32.mrb[0].mxu0
    %1044 = vmatprep.mubr.f32.mxu0 0.0
    %1045 = vmatmul.mubr.f32.gmra.mrb[0].mxu0 %v970
    %v1046 = vpop.f32.mrb[0].mxu0
    %v1047 = vadd.f32 %v965, %v1046
    %v1048 = vpop.f32.mrb[0].mxu0
    %1049 = vdwg.mxu0
    %v1050 = vsel %vm213, %v1047, 0.0
    %v1051 = vadd.f32 %v1042, %v1050
    %v1052 = vrot.slane %v1051, 4
    %v1053 = vadd.f32 %v1051, %v1052
    %v1054 = vrot.slane %v1053, 2
    %v1055 = vadd.f32 %v1053, %v1054
    %v1056 = vrot.slane %v1055, 1
    %v1057 = vadd.f32 %v1055, %v1056
    %v1058 = vmul.f32 %v1057, %v359
    %v1059 = vsub.f32 %v1042, %v1058
    %v1060 = vsub.f32 %v1047, %v1058
    %v1061 = vmul.f32 %v1059, %v1059
    %v1062 = vmul.f32 %v1060, %v1060
    %v1063 = vsel %vm213, %v1062, 0.0
    %v1064 = vadd.f32 %v1061, %v1063
    %v1065 = vrot.slane %v1064, 4
    %v1066 = vadd.f32 %v1064, %v1065
    %v1067 = vrot.slane %v1066, 2
    %v1068 = vadd.f32 %v1066, %v1067
    %v1069 = vrot.slane %v1068, 1
    %v1070 = vadd.f32 %v1068, %v1069
    %v1071 = vmul.f32 %v1070, %v359
    %v1072 = vadd.f32 %v1071, 1e-05
    %v1073 = vrsqrt.pop %v1072
    %v1074 = vmul.f32 %v763, %v1073
    %v1075 = vmul.f32 %v1058, %v1074
    %v1077 = vrot.slane %v1075, 7
    %v1079 = vsub.f32 %v763, %v1077
    %v1080 = vlaneseq
    %v1081 = vshrl.u32 %v1080, 7
    %v1082 = vsub.s32 3, %v1081
    %v1083 = vrot.slane %v1074, %v1082
    %v1084 = vmul.f32 %v1042, %v1083
    %v1085 = vmul.f32 %v1047, %v1083
    %v1086 = vlaneseq
    %v1087 = vshrl.u32 %v1086, 7
    %v1088 = vsub.s32 4, %v1087
    %v1089 = vrot.slane %v1079, %v1088
    %v1090 = vadd.f32 %v1084, %v1089
    %v1091 = vadd.f32 %v1085, %v1089
    %v1092 = vmax.f32 %v1090, 0.0
    %v1093 = vmax.f32 %v1091, 0.0
    %1094 = vst [vmem:[#allocation6] sm:$0xff] %v1092
    %1095 = vst [vmem:[#allocation6 + $0x8] sm:$0xf] %v1093
    %v1096 = vld [vmem:[%s4] sm:$0x3]
    %v1098 = vsel %vm233, %v1096, 0
    %v1101 = vsel %vm213, %v1093, 0
    %1103 = vmatprep.subr.mxu0 0.0
    %1104 = vmatpush1.msra.mxu0 %v1092
    %1105 = vmatprep.subr.mxu0 0.0
    %1106 = vmatpush1.msra.mxu0 %v1101
    %1107 = vmatprep.subr.mxu0 0.0
    %1108 = vmatpush1.msra.mxu0 0.0
    %1109 = vmatprep.subr.mxu0 0.0
    %1110 = vmatpush1.msra.mxu0 0.0
    %1111 = vmatprep.subr.mxu0 0.0
    %1112 = vmatpush1.msra.mxu0 0.0
    %1113 = vmatprep.subr.mxu0 0.0
    %1114 = vmatpush1.msra.mxu0 0.0
    %1115 = vmatprep.subr.mxu0 0.0
    %1116 = vmatpush1.msra.mxu0 0.0
    %1117 = vmatprep.subr.mxu0 0.0
    %1118 = vmatpush1.msra.mxu0 0.0
    %1119 = vmatprep.subr.mxu0 0.0
    %1120 = vmatpush1.msra.mxu0 0.0
    %1121 = vmatprep.subr.mxu0 0.0
    %1122 = vmatpush1.msra.mxu0 0.0
    %1123 = vmatprep.subr.mxu0 0.0
    %1124 = vmatpush1.msra.mxu0 0.0
    %1125 = vmatprep.subr.mxu0 0.0
    %1126 = vmatpush1.msra.mxu0 0.0
    %1127 = vmatprep.subr.mxu0 0.0
    %1128 = vmatpush1.msra.mxu0 0.0
    %1129 = vmatprep.subr.mxu0 0.0
    %1130 = vmatpush1.msra.mxu0 0.0
    %1131 = vmatprep.subr.mxu0 0.0
    %1132 = vmatpush1.msra.mxu0 0.0
    %1133 = vmatprep.subr.mxu0 0.0
    %1134 = vmatpush1.msra.mxu0 0.0
    %1135 = vmatprep.subr.mxu0 0.0
    %1136 = vmatpush1.msra.mxu0 0.0
    %1137 = vmatprep.subr.mxu0 0.0
    %1138 = vmatpush1.msra.mxu0 0.0
    %1139 = vmatprep.subr.mxu0 0.0
    %1140 = vmatpush1.msra.mxu0 0.0
    %1141 = vmatprep.subr.mxu0 0.0
    %1142 = vmatpush1.msra.mxu0 0.0
    %1143 = vmatprep.subr.mxu0 0.0
    %1144 = vmatpush1.msra.mxu0 0.0
    %1145 = vmatprep.subr.mxu0 0.0
    %1146 = vmatpush1.msra.mxu0 0.0
    %1147 = vmatprep.subr.mxu0 0.0
    %1148 = vmatpush1.msra.mxu0 0.0
    %1149 = vmatprep.subr.mxu0 0.0
    %1150 = vmatpush1.msra.mxu0 0.0
    %1151 = vmatprep.subr.mxu0 0.0
    %1152 = vmatpush1.msra.mxu0 0.0
    %1153 = vmatprep.subr.mxu0 0.0
    %1154 = vmatpush1.msra.mxu0 0.0
    %1155 = vmatprep.subr.mxu0 0.0
    %1156 = vmatpush1.msra.mxu0 0.0
    %1157 = vmatprep.subr.mxu0 0.0
    %1158 = vmatpush1.msra.mxu0 0.0
    %1159 = vmatprep.subr.mxu0 0.0
    %1160 = vmatpush1.msra.mxu0 0.0
    %1161 = vmatprep.subr.mxu0 0.0
    %1162 = vmatpush1.msra.mxu0 0.0
    %1163 = vmatprep.subr.mxu0 0.0
    %1164 = vmatpush1.msra.mxu0 0.0
    %1165 = vmatprep.subr.mxu0 0.0
    %1166 = vmatpush1.msra.mxu0 0.0
    %1167 = vmatprep.mubr.f32.mxu0 0.0
    %1168 = vmatmul.mubr.f32.gmra.mrb[0].mxu0 %v1098
    %v1169 = vpop.f32.mrb[0].mxu0
    %v1170 = vadd.f32 0.0, %v1169
    %v1171 = vpop.f32.mrb[0].mxu0
    %1172 = vdwg.mxu0
    %1173 = vst [vmem:[#allocation8] sm:$0x3] %v1170
    %s1174 = scalar_lea.vmem [#allocation2], 384
    %v1175 = vld [vmem:[%s1174] sm:$0xff]
    %v1176 = vld [vmem:[%s1174 + $0x8] sm:$0xff]
    %v1177 = vld [vmem:[%s1174 + $0x10] sm:$0xff]
    %v1178 = vld [vmem:[%s1174 + $0x18] sm:$0xff]
    %v1179 = vld [vmem:[%s1174 + $0x20] sm:$0xff]
    %v1180 = vld [vmem:[%s1174 + $0x28] sm:$0xff]
    %v1181 = vld [vmem:[%s1174 + $0x30] sm:$0xff]
    %v1182 = vld [vmem:[%s1174 + $0x38] sm:$0xff]
    %v1183 = vld [vmem:[%s1174 + $0x40] sm:$0xff]
    %v1184 = vld [vmem:[%s1174 + $0x48] sm:$0xff]
    %v1185 = vld [vmem:[%s1174 + $0x50] sm:$0xff]
    %v1186 = vld [vmem:[%s1174 + $0x58] sm:$0xff]
    %v1187 = vld [vmem:[%s1174 + $0x60] sm:$0xff]
    %v1188 = vld [vmem:[%s1174 + $0x68] sm:$0xff]
    %v1189 = vld [vmem:[%s1174 + $0x70] sm:$0xff]
    %v1190 = vld [vmem:[%s1174 + $0x78] sm:$0xff]
    %s1191 = scalar_lea.vmem %s3, 24
    %v1192 = vld [vmem:[%s1191] sm:$0x1f]
    %v1193 = vlaneseq
    %v1194 = vshrl.u32 %v1193, 7
    %v1195 = vsub.s32 2, %v1194
    %v1196 = vrot.slane %v1192, %v1195
    %1197 = vmatprep.subr.mxu0 0.0
    %1198 = vmatpush1.msra.mxu0 %v1175
    %1199 = vmatprep.subr.mxu0 0.0
    %1200 = vmatpush1.msra.mxu0 %v1176
    %1201 = vmatprep.subr.mxu0 0.0
    %1202 = vmatpush1.msra.mxu0 %v1177
    %1203 = vmatprep.subr.mxu0 0.0
    %1204 = vmatpush1.msra.mxu0 %v1178
    %1205 = vmatprep.subr.mxu0 0.0
    %1206 = vmatpush1.msra.mxu0 %v1179
    %1207 = vmatprep.subr.mxu0 0.0
    %1208 = vmatpush1.msra.mxu0 %v1180
    %1209 = vmatprep.subr.mxu0 0.0
    %1210 = vmatpush1.msra.mxu0 %v1181
    %1211 = vmatprep.subr.mxu0 0.0
    %1212 = vmatpush1.msra.mxu0 %v1182
    %1213 = vmatprep.subr.mxu0 0.0
    %1214 = vmatpush1.msra.mxu0 %v1183
    %1215 = vmatprep.subr.mxu0 0.0
    %1216 = vmatpush1.msra.mxu0 %v1184
    %1217 = vmatprep.subr.mxu0 0.0
    %1218 = vmatpush1.msra.mxu0 %v1185
    %1219 = vmatprep.subr.mxu0 0.0
    %1220 = vmatpush1.msra.mxu0 %v1186
    %1221 = vmatprep.subr.mxu0 0.0
    %1222 = vmatpush1.msra.mxu0 %v1187
    %1223 = vmatprep.subr.mxu0 0.0
    %1224 = vmatpush1.msra.mxu0 %v1188
    %1225 = vmatprep.subr.mxu0 0.0
    %1226 = vmatpush1.msra.mxu0 %v1189
    %1227 = vmatprep.subr.mxu0 0.0
    %1228 = vmatpush1.msra.mxu0 %v1190
    %1229 = vmatprep.subr.mxu0 0.0
    %1230 = vmatpush1.msra.mxu0 0.0
    %1231 = vmatprep.subr.mxu0 0.0
    %1232 = vmatpush1.msra.mxu0 0.0
    %1233 = vmatprep.subr.mxu0 0.0
    %1234 = vmatpush1.msra.mxu0 0.0
    %1235 = vmatprep.subr.mxu0 0.0
    %1236 = vmatpush1.msra.mxu0 0.0
    %1237 = vmatprep.subr.mxu0 0.0
    %1238 = vmatpush1.msra.mxu0 0.0
    %1239 = vmatprep.subr.mxu0 0.0
    %1240 = vmatpush1.msra.mxu0 0.0
    %1241 = vmatprep.subr.mxu0 0.0
    %1242 = vmatpush1.msra.mxu0 0.0
    %1243 = vmatprep.subr.mxu0 0.0
    %1244 = vmatpush1.msra.mxu0 0.0
    %1245 = vmatprep.subr.mxu0 0.0
    %1246 = vmatpush1.msra.mxu0 0.0
    %1247 = vmatprep.subr.mxu0 0.0
    %1248 = vmatpush1.msra.mxu0 0.0
    %1249 = vmatprep.subr.mxu0 0.0
    %1250 = vmatpush1.msra.mxu0 0.0
    %1251 = vmatprep.subr.mxu0 0.0
    %1252 = vmatpush1.msra.mxu0 0.0
    %1253 = vmatprep.subr.mxu0 0.0
    %1254 = vmatpush1.msra.mxu0 0.0
    %1255 = vmatprep.subr.mxu0 0.0
    %1256 = vmatpush1.msra.mxu0 0.0
    %1257 = vmatprep.subr.mxu0 0.0
    %1258 = vmatpush1.msra.mxu0 0.0
    %1259 = vmatprep.subr.mxu0 0.0
    %1260 = vmatpush1.msra.mxu0 0.0
    %1261 = vmatprep.mubr.f32.mxu0 0.0
    %1262 = vmatmul.mubr.f32.gmra.mrb[0].mxu0 %v1170
    %v1263 = vpop.f32.mrb[0].mxu0
    %v1264 = vadd.f32 %v1196, %v1263
    %v1265 = vpop.f32.mrb[0].mxu0
    %1266 = vdwg.mxu0
    %1267 = vst [vmem:[#allocation5] sm:$0x3] %v1264
    // Predicated region
    $region26: #{gat_nci1_forward.1} parent=1 // pred_check
      _
    $region27: #{gat_nci1_forward.1} parent=1 // pred_check_branch
      %1269 = sbr.rel (0) target = $region29
    $region28: #{gat_nci1_forward.1} parent=1 // pred_region
      %s1271 = ssub.s32 32, 32
      %1272 = vsyncadd [#allocation4], %s1271
      %s1274 = sshll.u32 [#allocation5], 4
      %s1275 = int_to_ptr.vmem [resolvable:$true] %s1274
      %1277 = dma.vmem_to_hbm [thread:$0]  %s1275, 32, %s5, [#allocation4]
    $region29: #{gat_nci1_forward.1} parent=1 // pred_fallthru
      _
    // Predicated region
    $region30: #{gat_nci1_forward.1} parent=1 // pred_check
      _
    $region31: #{gat_nci1_forward.1} parent=1 // pred_check_branch
      %1279 = sbr.rel (0) target = $region33
    $region32: #{gat_nci1_forward.1} parent=1 // pred_region
      %s1281 = ssub.s32 256, 256
      %1282 = vsyncadd [#allocation7], %s1281
      %s1283 = sshll.u32 [#allocation6], 4
      %s1284 = int_to_ptr.vmem [resolvable:$true] %s1283
      %1289 = dma.vmem_to_hbm [thread:$0]  %s1284, 256, %s6, [#allocation7], 128, 128, 8
    $region33: #{gat_nci1_forward.1} parent=1 // pred_fallthru
      _
    // Predicated region
    $region34: #{gat_nci1_forward.1} parent=1 // pred_check
      _
    $region35: #{gat_nci1_forward.1} parent=1 // pred_check_branch
      %1291 = sbr.rel (0) target = $region37
    $region36: #{gat_nci1_forward.1} parent=1 // pred_region
      %s1293 = ssub.s32 32, 32
      %1294 = vsyncadd [#allocation7], %s1293
      %s1296 = sshll.u32 [#allocation8], 4
      %s1297 = int_to_ptr.vmem [resolvable:$true] %s1296
      %1299 = dma.vmem_to_hbm [thread:$0]  %s1297, 32, %s7, [#allocation7]
    $region37: #{gat_nci1_forward.1} parent=1 // pred_fallthru
      _
    // Predicated region
    $region38: #{gat_nci1_forward.1} parent=1 // pred_check
      _
    $region39: #{gat_nci1_forward.1} parent=1 // pred_check_branch
      %1301 = sbr.rel (0) target = $region41
    $region40: #{gat_nci1_forward.1} parent=1 // pred_region
      %1302 = dma.done [#allocation4], 32
    $region41: #{gat_nci1_forward.1} parent=1 // pred_fallthru
      _
    // Predicated region
    $region42: #{gat_nci1_forward.1} parent=1 // pred_check
      _
    $region43: #{gat_nci1_forward.1} parent=1 // pred_check_branch
      %1304 = sbr.rel (0) target = $region45
    $region44: #{gat_nci1_forward.1} parent=1 // pred_region
      %1305 = dma.done [#allocation7], 256
    $region45: #{gat_nci1_forward.1} parent=1 // pred_fallthru
      _
    // Predicated region
    $region46: #{gat_nci1_forward.1} parent=1 // pred_check
      _
    $region47: #{gat_nci1_forward.1} parent=1 // pred_check_branch
      %1307 = sbr.rel (0) target = $region49
    $region48: #{gat_nci1_forward.1} parent=1 // pred_region
      %1308 = dma.done [#allocation7], 32
    $region49: #{gat_nci1_forward.1} parent=1 // pred_fallthru
      _
    %1309 = vsyncpa [#allocation3], 1
    %1310 = vsyncpa [#allocation4], 1
    %1311 = vsyncpa [#allocation7], 1

</llo_original>
